<compile_context>
chip_gen: v7x
topology: tpu7x:2x2x1
jax: 0.10.0
libtpu: 0.0.40
codegen_flags: <defaults>
</compile_context>

<pallas_src>
import functools

import numpy as np
import jax
import jax.numpy as jnp
from jax.experimental import pallas as pl
from jax.experimental.pallas import tpu as pltpu

_MEAN = 0.5
_STD = 0.5


def _round_up(x: int, m: int) -> int:
    return ((x + m - 1) // m) * m


def _bilinear_matrix(out_size: int, in_size: int) -> np.ndarray:
    """Interpolation matrix (out_size, in_size) for bilinear resize,
    align_corners=False (matches torch F.interpolate / torchvision Resize for upscaling)."""
    scale = in_size / out_size
    i = np.arange(out_size, dtype=np.float64)
    src = (i + 0.5) * scale - 0.5
    i0 = np.floor(src).astype(np.int64)
    frac = src - i0
    i0c = np.clip(i0, 0, in_size - 1)
    i1c = np.clip(i0 + 1, 0, in_size - 1)
    w = np.zeros((out_size, in_size), dtype=np.float64)
    w[np.arange(out_size), i0c] += 1.0 - frac
    w[np.arange(out_size), i1c] += frac
    return w


@functools.lru_cache(maxsize=None)
def _fused_weight(h_in: int, w_in: int, out_size: int):
    """Fused (bilinear-resize x 1/std) matrix, cached per geometry.

    For 28->32 resizing every entry is an exact multiple of 1/128, so bf16 is lossless."""
    wr = _bilinear_matrix(out_size, h_in)          # (H_out, H_in)
    wc = _bilinear_matrix(out_size, w_in)          # (W_out, W_in)
    w_full = np.kron(wr.T, wc.T) / _STD            # (H_in*W_in, H_out*W_out)
    return jnp.asarray(w_full, dtype=jnp.bfloat16)


def _fused_resize_normalize_kernel(x_ref, w_ref, o_ref, *, bias: float):
    # x_ref: (TB, H_in*W_in)  f32 block of flattened image planes (lane-dense)
    # w_ref: (H_in*W_in, H_out*W_out)  bf16 fused interp matrix (resident, single-buffered)
    # o_ref: (TB, H_out*W_out)  f32 lane-dense output block
    x_bf = x_ref[...].astype(jnp.bfloat16)         # cheap VPU cast -> native bf16 MXU matmul
    o_ref[...] = (
        jnp.dot(x_bf, w_ref[...], preferred_element_type=jnp.float32) + bias
    )


def _weight_spec(hw_in: int, hw_out: int) -> pl.BlockSpec:
    idx = lambda i: (0, 0)
    try:
        # Constant index_map -> the block is never re-fetched; a single buffer saves ~1.5 MiB.
        return pl.BlockSpec((hw_in, hw_out), idx, pipeline_mode=pl.Buffered(1))
    except (AttributeError, TypeError, ValueError):
        return pl.BlockSpec((hw_in, hw_out), idx)


@functools.partial(jax.jit, static_argnames=("input_size",))
def _mnist_transform_eval(x, *, input_size: int):
    N, C, H, W = x.shape
    B = N * C
    HW_in = H * W
    HW_out = input_size * input_size

    bias = -_MEAN / _STD
    w_scaled = _fused_weight(H, W, input_size)     # constant baked into the executable

    # Plane-tile size: largest tile that fits every generation's scoped-VMEM default
    # (f32 in 2x + f32 out 2x + bf16 weight 1x at TB=512 is ~8.6 MiB < 16 MiB on v5e).
    TB = min(512, _round_up(B, 8))
    # v7x megacore: batches with enough work get >= 2 "parallel" grid steps (one per TC).
    if B >= 16 and pl.cdiv(B, TB) < 2:
        TB = _round_up(pl.cdiv(B, 2), 8)

    xf = x.reshape(B, HW_in).astype(jnp.float32)   # free reshape; no padding / extra copies

    kernel = functools.partial(_fused_resize_normalize_kernel, bias=bias)

    out_flat = pl.pallas_call(
        kernel,
        out_shape=jax.ShapeDtypeStruct((B, HW_out), jnp.float32),
        grid_spec=pltpu.PrefetchScalarGridSpec(
            num_scalar_prefetch=0,
            grid=(pl.cdiv(B, TB),),                # ragged last block masked by Pallas
            in_specs=[
                pl.BlockSpec((TB, HW_in), lambda i: (i, 0)),
                _weight_spec(HW_in, HW_out),
            ],
            out_specs=pl.BlockSpec((TB, HW_out), lambda i: (i, 0)),
        ),
        compiler_params=pltpu.CompilerParams(
            dimension_semantics=("parallel",),
        ),
    )(xf, w_scaled)

    return out_flat.reshape(N, C, input_size, input_size)


def mnist_transform(x, input_size: int, train_mode: bool = False):
    """Pallas equivalent of MNISTTransform.forward."""
    if train_mode:
        # TODO(synk): RandomAffine(10, translate=(0.02, 0.02), scale=(0.9, 1.1)) grid sampling
        # is not implemented as a Pallas kernel; raise instead of silently returning eval.
        raise NotImplementedError("MNISTTransform train_mode (RandomAffine) not implemented")
    assert x.shape[1] == 3, "Normalize((0.5,)*3, (0.5,)*3) implies 3 channels"
    return _mnist_transform_eval(x, input_size=input_size)


def _reference_np(x_np: np.ndarray, input_size: int) -> np.ndarray:
    """float64 numpy reference: bilinear resize (align_corners=False) + normalize."""
    wr = _bilinear_matrix(input_size, x_np.shape[2])
    wc = _bilinear_matrix(input_size, x_np.shape[3])
    y = np.einsum("oh,nchw->ncow", wr, x_np.astype(np.float64))
    y = np.einsum("pw,ncow->ncop", wc, y)
    return (y - _MEAN) / _STD


if __name__ == "__main__":
    key = jax.random.PRNGKey(0)
    N, C, H, W = 2, 3, 28, 28          # MNIST-like planes, 3 channels for Normalize
    input_size = 32
    x = jax.random.uniform(key, (N, C, H, W), dtype=jnp.float32)

    out = mnist_transform(x, input_size, train_mode=False)
    out = jax.block_until_ready(out)
    assert out.shape == (N, C, input_size, input_size), out.shape

    # The kernel quantizes activations to bf16 for the MXU (weights are exact in bf16):
    # compare tightly against a reference fed the same bf16-rounded input, and loosely
    # against the full-precision reference.
    x_np = np.asarray(x)
    x_bf = np.asarray(jnp.asarray(x, jnp.bfloat16).astype(jnp.float32))
    np.testing.assert_allclose(np.asarray(out), _reference_np(x_bf, input_size),
                               rtol=1e-5, atol=1e-4)
    np.testing.assert_allclose(np.asarray(out), _reference_np(x_np, input_size),
                               rtol=0, atol=1e-2)

    print("KERNEL_OK")
</pallas_src>

<mosaic_0001>
module attributes {stable_mosaic.version = 11 : i64} {
  func.func @_fused_resize_normalize_kernel(%arg0: i32, %arg1: memref<8x784xf32, #tpu.memory_space<vmem>>, %arg2: memref<784x1024xbf16, #tpu.memory_space<vmem>>, %arg3: memref<8x1024xf32, #tpu.memory_space<vmem>>) attributes {dimension_semantics = [#tpu.dimension_semantics<parallel>], iteration_bounds = array<i64: 1>, scalar_prefetch = 0 : i64, scratch_operands = 0 : i64, tpu.core_type = #tpu.core_type<tc>, window_params = [{transform_indices = @transform_0, window_bounds = array<i64: 8, 784>}, {pipeline_mode = #tpu.pipeline_mode<synchronous>, transform_indices = @transform_1, window_bounds = array<i64: 784, 1024>}, {transform_indices = @transform_2, window_bounds = array<i64: 8, 1024>}]} {
    %c0 = arith.constant 0 : index
    %c0_0 = arith.constant 0 : index
    %0 = vector.load %arg1[%c0, %c0_0] : memref<8x784xf32, #tpu.memory_space<vmem>>, vector<8x784xf32>
    %1 = arith.truncf %0 : vector<8x784xf32> to vector<8x784xbf16>
    %c0_1 = arith.constant 0 : index
    %c0_2 = arith.constant 0 : index
    %2 = vector.load %arg2[%c0_1, %c0_2] : memref<784x1024xbf16, #tpu.memory_space<vmem>>, vector<784x1024xbf16>
    %cst = arith.constant dense<0.000000e+00> : vector<8x1024xf32>
    %3 = tpu.matmul %1, %2, %cst {dimension_numbers = #tpu.dot_dimension_numbers<[1], [0], [0], [1], [0, 0, 1, 1], [], []>} : vector<8x784xbf16>, vector<784x1024xbf16>, vector<8x1024xf32> -> vector<8x1024xf32>
    %cst_3 = arith.constant -1.000000e+00 : f32
    %4 = vector.broadcast %cst_3 : f32 to vector<8x1024xf32>
    %5 = arith.addf %3, %4 : vector<8x1024xf32>
    %c0_4 = arith.constant 0 : index
    %c0_5 = arith.constant 0 : index
    %6 = vector.load %arg3[%c0_4, %c0_5] : memref<8x1024xf32, #tpu.memory_space<vmem>>, vector<8x1024xf32>
    tpu.vector_store %arg3[%c0_4, %c0_5], %5 {strides = array<i32>} : memref<8x1024xf32, #tpu.memory_space<vmem>>, vector<8x1024xf32>,
    return
  }
  func.func @transform_0(%arg0: i32) -> (i32, i32) {
    %c0_i32 = arith.constant 0 : i32
    %c0_i32_0 = arith.constant 0 : i32
    return %arg0, %c0_i32 : i32, i32
  }
  func.func @transform_1(%arg0: i32) -> (i32, i32) {
    %c0_i32 = arith.constant 0 : i32
    %c0_i32_0 = arith.constant 0 : i32
    %c0_i32_1 = arith.constant 0 : i32
    return %c0_i32, %c0_i32_0 : i32, i32
  }
  func.func @transform_2(%arg0: i32) -> (i32, i32) {
    %c0_i32 = arith.constant 0 : i32
    %c0_i32_0 = arith.constant 0 : i32
    return %arg0, %c0_i32 : i32, i32
  }
}

</mosaic_0001>

<llo_original>
// kernel: _mnist_transform_eval.1
$region0: #{_mnist_transform_eval.1}
  #allocation0 [shape = 'u32[]', space=smem, size = 0x4, offset = 0x4, fixed_abs, tag = 'smem constant byte address 0x4 - core index']
  #allocation1 [shape = 'u32[144,128]{1,0:T(1,128)}', space=vmem, size = 0x12000, scoped, tag = 'internal scratch']
  %s0 = inlined_call_operand.vmem [shape: f32[6,784], index: 0, kind: input, shape index: {}]
  %s1 = inlined_call_operand.vmem [shape: bf16[784,1024], index: 1, kind: input, shape index: {}]
  %s2 = inlined_call_operand.vmem [shape: f32[6,1024], index: 2, kind: output, shape index: {}]
  %s3 = sld [smem:[#allocation0]]
  $region18: #{_mnist_transform_eval.1} parent=0
    _
  %s5 = ssub.s32 1, %s3
  %s6 = scalar_select 0, %s5, %s3
  // Predicated region
  $region2: #{_mnist_transform_eval.1} parent=0 // pred_check
    _
  $region3: #{_mnist_transform_eval.1} parent=0 // pred_check_branch
    %8 = sbr.rel (0) target = $region5
  $region4: #{_mnist_transform_eval.1} parent=0 // pred_region
    _
  $region5: #{_mnist_transform_eval.1} parent=0 // pred_fallthru
    _
  // Predicated region
  $region6: #{_mnist_transform_eval.1} parent=0 // pred_check
    _
  $region7: #{_mnist_transform_eval.1} parent=0 // pred_check_branch
    %10 = sbr.rel (0) target = $region9
  $region8: #{_mnist_transform_eval.1} parent=0 // pred_region
    _
  $region9: #{_mnist_transform_eval.1} parent=0 // pred_fallthru
    _
  %v12 = vld [vmem:[%s0] sm:$0xff]
  %v13 = vld [vmem:[%s0 + $0x8] sm:$0xff]
  %v14 = vld [vmem:[%s0 + $0x10] sm:$0xff]
  %v15 = vld [vmem:[%s0 + $0x18] sm:$0xff]
  %v16 = vld [vmem:[%s0 + $0x20] sm:$0xff]
  %v17 = vld [vmem:[%s0 + $0x28] sm:$0xff]
  %v18 = vld [vmem:[%s0 + $0x30] sm:$0xff]
  %v19 = vpack.c.bf16 %v12, %v12
  %v20 = vpack.c.bf16 %v13, %v13
  %v21 = vpack.c.bf16 %v14, %v14
  %v22 = vpack.c.bf16 %v15, %v15
  %v23 = vpack.c.bf16 %v16, %v16
  %v24 = vpack.c.bf16 %v17, %v17
  %v25 = vpack.c.bf16 %v18, %v18
  %v26 = vld [vmem:[%s1] sm:$0xff]
  %v27 = vld [vmem:[%s1 + $0x8] sm:$0xff]
  %v28 = vld [vmem:[%s1 + $0x10] sm:$0xff]
  %v29 = vld [vmem:[%s1 + $0x18] sm:$0xff]
  %v30 = vld [vmem:[%s1 + $0x20] sm:$0xff]
  %v31 = vld [vmem:[%s1 + $0x28] sm:$0xff]
  %v32 = vld [vmem:[%s1 + $0x30] sm:$0xff]
  %v33 = vld [vmem:[%s1 + $0x38] sm:$0xff]
  %v34 = vld [vmem:[%s1 + $0x40] sm:$0xff]
  %v35 = vld [vmem:[%s1 + $0x48] sm:$0xff]
  %v36 = vld [vmem:[%s1 + $0x50] sm:$0xff]
  %v37 = vld [vmem:[%s1 + $0x58] sm:$0xff]
  %v38 = vld [vmem:[%s1 + $0x60] sm:$0xff]
  %v39 = vld [vmem:[%s1 + $0x68] sm:$0xff]
  %v40 = vld [vmem:[%s1 + $0x70] sm:$0xff]
  %v41 = vld [vmem:[%s1 + $0x78] sm:$0xff]
  %v42 = vld [vmem:[%s1 + $0x80] sm:$0xff]
  %v43 = vld [vmem:[%s1 + $0x88] sm:$0xff]
  %v44 = vld [vmem:[%s1 + $0x90] sm:$0xff]
  %v45 = vld [vmem:[%s1 + $0x98] sm:$0xff]
  %v46 = vld [vmem:[%s1 + $0xa0] sm:$0xff]
  %v47 = vld [vmem:[%s1 + $0xa8] sm:$0xff]
  %v48 = vld [vmem:[%s1 + $0xb0] sm:$0xff]
  %v49 = vld [vmem:[%s1 + $0xb8] sm:$0xff]
  %v50 = vld [vmem:[%s1 + $0xc0] sm:$0xff]
  %v51 = vld [vmem:[%s1 + $0xc8] sm:$0xff]
  %v52 = vld [vmem:[%s1 + $0xd0] sm:$0xff]
  %v53 = vld [vmem:[%s1 + $0xd8] sm:$0xff]
  %v54 = vld [vmem:[%s1 + $0xe0] sm:$0xff]
  %v55 = vld [vmem:[%s1 + $0xe8] sm:$0xff]
  %v56 = vld [vmem:[%s1 + $0xf0] sm:$0xff]
  %v57 = vld [vmem:[%s1 + $0xf8] sm:$0xff]
  %v58 = vld [vmem:[%s1 + $0x100] sm:$0xff]
  %v59 = vld [vmem:[%s1 + $0x108] sm:$0xff]
  %v60 = vld [vmem:[%s1 + $0x110] sm:$0xff]
  %v61 = vld [vmem:[%s1 + $0x118] sm:$0xff]
  %v62 = vld [vmem:[%s1 + $0x120] sm:$0xff]
  %v63 = vld [vmem:[%s1 + $0x128] sm:$0xff]
  %v64 = vld [vmem:[%s1 + $0x130] sm:$0xff]
  %v65 = vld [vmem:[%s1 + $0x138] sm:$0xff]
  %v66 = vld [vmem:[%s1 + $0x140] sm:$0xff]
  %v67 = vld [vmem:[%s1 + $0x148] sm:$0xff]
  %v68 = vld [vmem:[%s1 + $0x150] sm:$0xff]
  %v69 = vld [vmem:[%s1 + $0x158] sm:$0xff]
  %v70 = vld [vmem:[%s1 + $0x160] sm:$0xff]
  %v71 = vld [vmem:[%s1 + $0x168] sm:$0xff]
  %v72 = vld [vmem:[%s1 + $0x170] sm:$0xff]
  %v73 = vld [vmem:[%s1 + $0x178] sm:$0xff]
  %v74 = vld [vmem:[%s1 + $0x180] sm:$0xff]
  %v75 = vld [vmem:[%s1 + $0x188] sm:$0xff]
  %v76 = vld [vmem:[%s1 + $0x190] sm:$0xff]
  %v77 = vld [vmem:[%s1 + $0x198] sm:$0xff]
  %v78 = vld [vmem:[%s1 + $0x1a0] sm:$0xff]
  %v79 = vld [vmem:[%s1 + $0x1a8] sm:$0xff]
  %v80 = vld [vmem:[%s1 + $0x1b0] sm:$0xff]
  %v81 = vld [vmem:[%s1 + $0x1b8] sm:$0xff]
  %v82 = vld [vmem:[%s1 + $0x1c0] sm:$0xff]
  %v83 = vld [vmem:[%s1 + $0x1c8] sm:$0xff]
  %v84 = vld [vmem:[%s1 + $0x1d0] sm:$0xff]
  %v85 = vld [vmem:[%s1 + $0x1d8] sm:$0xff]
  %v86 = vld [vmem:[%s1 + $0x1e0] sm:$0xff]
  %v87 = vld [vmem:[%s1 + $0x1e8] sm:$0xff]
  %v88 = vld [vmem:[%s1 + $0x1f0] sm:$0xff]
  %v89 = vld [vmem:[%s1 + $0x1f8] sm:$0xff]
  %v90 = vld [vmem:[%s1 + $0x200] sm:$0xff]
  %v91 = vld [vmem:[%s1 + $0x208] sm:$0xff]
  %v92 = vld [vmem:[%s1 + $0x210] sm:$0xff]
  %v93 = vld [vmem:[%s1 + $0x218] sm:$0xff]
  %v94 = vld [vmem:[%s1 + $0x220] sm:$0xff]
  %v95 = vld [vmem:[%s1 + $0x228] sm:$0xff]
  %v96 = vld [vmem:[%s1 + $0x230] sm:$0xff]
  %v97 = vld [vmem:[%s1 + $0x238] sm:$0xff]
  %v98 = vld [vmem:[%s1 + $0x240] sm:$0xff]
  %v99 = vld [vmem:[%s1 + $0x248] sm:$0xff]
  %v100 = vld [vmem:[%s1 + $0x250] sm:$0xff]
  %v101 = vld [vmem:[%s1 + $0x258] sm:$0xff]
  %v102 = vld [vmem:[%s1 + $0x260] sm:$0xff]
  %v103 = vld [vmem:[%s1 + $0x268] sm:$0xff]
  %v104 = vld [vmem:[%s1 + $0x270] sm:$0xff]
  %v105 = vld [vmem:[%s1 + $0x278] sm:$0xff]
  %v106 = vld [vmem:[%s1 + $0x280] sm:$0xff]
  %v107 = vld [vmem:[%s1 + $0x288] sm:$0xff]
  %v108 = vld [vmem:[%s1 + $0x290] sm:$0xff]
  %v109 = vld [vmem:[%s1 + $0x298] sm:$0xff]
  %v110 = vld [vmem:[%s1 + $0x2a0] sm:$0xff]
  %v111 = vld [vmem:[%s1 + $0x2a8] sm:$0xff]
  %v112 = vld [vmem:[%s1 + $0x2b0] sm:$0xff]
  %v113 = vld [vmem:[%s1 + $0x2b8] sm:$0xff]
  %v114 = vld [vmem:[%s1 + $0x2c0] sm:$0xff]
  %v115 = vld [vmem:[%s1 + $0x2c8] sm:$0xff]
  %v116 = vld [vmem:[%s1 + $0x2d0] sm:$0xff]
  %v117 = vld [vmem:[%s1 + $0x2d8] sm:$0xff]
  %v118 = vld [vmem:[%s1 + $0x2e0] sm:$0xff]
  %v119 = vld [vmem:[%s1 + $0x2e8] sm:$0xff]
  %v120 = vld [vmem:[%s1 + $0x2f0] sm:$0xff]
  %v121 = vld [vmem:[%s1 + $0x2f8] sm:$0xff]
  %v122 = vld [vmem:[%s1 + $0x300] sm:$0xff]
  %v123 = vld [vmem:[%s1 + $0x308] sm:$0xff]
  %v124 = vld [vmem:[%s1 + $0x310] sm:$0xff]
  %v125 = vld [vmem:[%s1 + $0x318] sm:$0xff]
  %v126 = vld [vmem:[%s1 + $0x320] sm:$0xff]
  %v127 = vld [vmem:[%s1 + $0x328] sm:$0xff]
  %v128 = vld [vmem:[%s1 + $0x330] sm:$0xff]
  %v129 = vld [vmem:[%s1 + $0x338] sm:$0xff]
  %v130 = vld [vmem:[%s1 + $0x340] sm:$0xff]
  %v131 = vld [vmem:[%s1 + $0x348] sm:$0xff]
  %v132 = vld [vmem:[%s1 + $0x350] sm:$0xff]
  %v133 = vld [vmem:[%s1 + $0x358] sm:$0xff]
  %v134 = vld [vmem:[%s1 + $0x360] sm:$0xff]
  %v135 = vld [vmem:[%s1 + $0x368] sm:$0xff]
  %v136 = vld [vmem:[%s1 + $0x370] sm:$0xff]
  %v137 = vld [vmem:[%s1 + $0x378] sm:$0xff]
  %v138 = vld [vmem:[%s1 + $0x380] sm:$0xff]
  %v139 = vld [vmem:[%s1 + $0x388] sm:$0xff]
  %v140 = vld [vmem:[%s1 + $0x390] sm:$0xff]
  %v141 = vld [vmem:[%s1 + $0x398] sm:$0xff]
  %v142 = vld [vmem:[%s1 + $0x3a0] sm:$0xff]
  %v143 = vld [vmem:[%s1 + $0x3a8] sm:$0xff]
  %v144 = vld [vmem:[%s1 + $0x3b0] sm:$0xff]
  %v145 = vld [vmem:[%s1 + $0x3b8] sm:$0xff]
  %v146 = vld [vmem:[%s1 + $0x3c0] sm:$0xff]
  %v147 = vld [vmem:[%s1 + $0x3c8] sm:$0xff]
  %v148 = vld [vmem:[%s1 + $0x3d0] sm:$0xff]
  %v149 = vld [vmem:[%s1 + $0x3d8] sm:$0xff]
  %v150 = vld [vmem:[%s1 + $0x3e0] sm:$0xff]
  %v151 = vld [vmem:[%s1 + $0x3e8] sm:$0xff]
  %v152 = vld [vmem:[%s1 + $0x3f0] sm:$0xff]
  %v153 = vld [vmem:[%s1 + $0x3f8] sm:$0xff]
  %v154 = vld [vmem:[%s1 + $0x400] sm:$0xff]
  %v155 = vld [vmem:[%s1 + $0x408] sm:$0xff]
  %v156 = vld [vmem:[%s1 + $0x410] sm:$0xff]
  %v157 = vld [vmem:[%s1 + $0x418] sm:$0xff]
  %v158 = vld [vmem:[%s1 + $0x420] sm:$0xff]
  %v159 = vld [vmem:[%s1 + $0x428] sm:$0xff]
  %v160 = vld [vmem:[%s1 + $0x430] sm:$0xff]
  %v161 = vld [vmem:[%s1 + $0x438] sm:$0xff]
  %v162 = vld [vmem:[%s1 + $0x440] sm:$0xff]
  %v163 = vld [vmem:[%s1 + $0x448] sm:$0xff]
  %v164 = vld [vmem:[%s1 + $0x450] sm:$0xff]
  %v165 = vld [vmem:[%s1 + $0x458] sm:$0xff]
  %v166 = vld [vmem:[%s1 + $0x460] sm:$0xff]
  %v167 = vld [vmem:[%s1 + $0x468] sm:$0xff]
  %v168 = vld [vmem:[%s1 + $0x470] sm:$0xff]
  %v169 = vld [vmem:[%s1 + $0x478] sm:$0xff]
  %v170 = vld [vmem:[%s1 + $0x480] sm:$0xff]
  %v171 = vld [vmem:[%s1 + $0x488] sm:$0xff]
  %v172 = vld [vmem:[%s1 + $0x490] sm:$0xff]
  %v173 = vld [vmem:[%s1 + $0x498] sm:$0xff]
  %v174 = vld [vmem:[%s1 + $0x4a0] sm:$0xff]
  %v175 = vld [vmem:[%s1 + $0x4a8] sm:$0xff]
  %v176 = vld [vmem:[%s1 + $0x4b0] sm:$0xff]
  %v177 = vld [vmem:[%s1 + $0x4b8] sm:$0xff]
  %v178 = vld [vmem:[%s1 + $0x4c0] sm:$0xff]
  %v179 = vld [vmem:[%s1 + $0x4c8] sm:$0xff]
  %v180 = vld [vmem:[%s1 + $0x4d0] sm:$0xff]
  %v181 = vld [vmem:[%s1 + $0x4d8] sm:$0xff]
  %v182 = vld [vmem:[%s1 + $0x4e0] sm:$0xff]
  %v183 = vld [vmem:[%s1 + $0x4e8] sm:$0xff]
  %v184 = vld [vmem:[%s1 + $0x4f0] sm:$0xff]
  %v185 = vld [vmem:[%s1 + $0x4f8] sm:$0xff]
  %v186 = vld [vmem:[%s1 + $0x500] sm:$0xff]
  %v187 = vld [vmem:[%s1 + $0x508] sm:$0xff]
  %v188 = vld [vmem:[%s1 + $0x510] sm:$0xff]
  %v189 = vld [vmem:[%s1 + $0x518] sm:$0xff]
  %v190 = vld [vmem:[%s1 + $0x520] sm:$0xff]
  %v191 = vld [vmem:[%s1 + $0x528] sm:$0xff]
  %v192 = vld [vmem:[%s1 + $0x530] sm:$0xff]
  %v193 = vld [vmem:[%s1 + $0x538] sm:$0xff]
  %v194 = vld [vmem:[%s1 + $0x540] sm:$0xff]
  %v195 = vld [vmem:[%s1 + $0x548] sm:$0xff]
  %v196 = vld [vmem:[%s1 + $0x550] sm:$0xff]
  %v197 = vld [vmem:[%s1 + $0x558] sm:$0xff]
  %v198 = vld [vmem:[%s1 + $0x560] sm:$0xff]
  %v199 = vld [vmem:[%s1 + $0x568] sm:$0xff]
  %v200 = vld [vmem:[%s1 + $0x570] sm:$0xff]
  %v201 = vld [vmem:[%s1 + $0x578] sm:$0xff]
  %v202 = vld [vmem:[%s1 + $0x580] sm:$0xff]
  %v203 = vld [vmem:[%s1 + $0x588] sm:$0xff]
  %v204 = vld [vmem:[%s1 + $0x590] sm:$0xff]
  %v205 = vld [vmem:[%s1 + $0x598] sm:$0xff]
  %v206 = vld [vmem:[%s1 + $0x5a0] sm:$0xff]
  %v207 = vld [vmem:[%s1 + $0x5a8] sm:$0xff]
  %v208 = vld [vmem:[%s1 + $0x5b0] sm:$0xff]
  %v209 = vld [vmem:[%s1 + $0x5b8] sm:$0xff]
  %v210 = vld [vmem:[%s1 + $0x5c0] sm:$0xff]
  %v211 = vld [vmem:[%s1 + $0x5c8] sm:$0xff]
  %v212 = vld [vmem:[%s1 + $0x5d0] sm:$0xff]
  %v213 = vld [vmem:[%s1 + $0x5d8] sm:$0xff]
  %v214 = vld [vmem:[%s1 + $0x5e0] sm:$0xff]
  %v215 = vld [vmem:[%s1 + $0x5e8] sm:$0xff]
  %v216 = vld [vmem:[%s1 + $0x5f0] sm:$0xff]
  %v217 = vld [vmem:[%s1 + $0x5f8] sm:$0xff]
  %v218 = vld [vmem:[%s1 + $0x600] sm:$0xff]
  %v219 = vld [vmem:[%s1 + $0x608] sm:$0xff]
  %v220 = vld [vmem:[%s1 + $0x610] sm:$0xff]
  %v221 = vld [vmem:[%s1 + $0x618] sm:$0xff]
  %v222 = vld [vmem:[%s1 + $0x620] sm:$0xff]
  %v223 = vld [vmem:[%s1 + $0x628] sm:$0xff]
  %v224 = vld [vmem:[%s1 + $0x630] sm:$0xff]
  %v225 = vld [vmem:[%s1 + $0x638] sm:$0xff]
  %v226 = vld [vmem:[%s1 + $0x640] sm:$0xff]
  %v227 = vld [vmem:[%s1 + $0x648] sm:$0xff]
  %v228 = vld [vmem:[%s1 + $0x650] sm:$0xff]
  %v229 = vld [vmem:[%s1 + $0x658] sm:$0xff]
  %v230 = vld [vmem:[%s1 + $0x660] sm:$0xff]
  %v231 = vld [vmem:[%s1 + $0x668] sm:$0xff]
  %v232 = vld [vmem:[%s1 + $0x670] sm:$0xff]
  %v233 = vld [vmem:[%s1 + $0x678] sm:$0xff]
  %v234 = vld [vmem:[%s1 + $0x680] sm:$0xff]
  %v235 = vld [vmem:[%s1 + $0x688] sm:$0xff]
  %v236 = vld [vmem:[%s1 + $0x690] sm:$0xff]
  %v237 = vld [vmem:[%s1 + $0x698] sm:$0xff]
  %v238 = vld [vmem:[%s1 + $0x6a0] sm:$0xff]
  %v239 = vld [vmem:[%s1 + $0x6a8] sm:$0xff]
  %v240 = vld [vmem:[%s1 + $0x6b0] sm:$0xff]
  %v241 = vld [vmem:[%s1 + $0x6b8] sm:$0xff]
  %v242 = vld [vmem:[%s1 + $0x6c0] sm:$0xff]
  %v243 = vld [vmem:[%s1 + $0x6c8] sm:$0xff]
  %v244 = vld [vmem:[%s1 + $0x6d0] sm:$0xff]
  %v245 = vld [vmem:[%s1 + $0x6d8] sm:$0xff]
  %v246 = vld [vmem:[%s1 + $0x6e0] sm:$0xff]
  %v247 = vld [vmem:[%s1 + $0x6e8] sm:$0xff]
  %v248 = vld [vmem:[%s1 + $0x6f0] sm:$0xff]
  %v249 = vld [vmem:[%s1 + $0x6f8] sm:$0xff]
  %v250 = vld [vmem:[%s1 + $0x700] sm:$0xff]
  %v251 = vld [vmem:[%s1 + $0x708] sm:$0xff]
  %v252 = vld [vmem:[%s1 + $0x710] sm:$0xff]
  %v253 = vld [vmem:[%s1 + $0x718] sm:$0xff]
  %v254 = vld [vmem:[%s1 + $0x720] sm:$0xff]
  %v255 = vld [vmem:[%s1 + $0x728] sm:$0xff]
  %v256 = vld [vmem:[%s1 + $0x730] sm:$0xff]
  %v257 = vld [vmem:[%s1 + $0x738] sm:$0xff]
  %v258 = vld [vmem:[%s1 + $0x740] sm:$0xff]
  %v259 = vld [vmem:[%s1 + $0x748] sm:$0xff]
  %v260 = vld [vmem:[%s1 + $0x750] sm:$0xff]
  %v261 = vld [vmem:[%s1 + $0x758] sm:$0xff]
  %v262 = vld [vmem:[%s1 + $0x760] sm:$0xff]
  %v263 = vld [vmem:[%s1 + $0x768] sm:$0xff]
  %v264 = vld [vmem:[%s1 + $0x770] sm:$0xff]
  %v265 = vld [vmem:[%s1 + $0x778] sm:$0xff]
  %v266 = vld [vmem:[%s1 + $0x780] sm:$0xff]
  %v267 = vld [vmem:[%s1 + $0x788] sm:$0xff]
  %v268 = vld [vmem:[%s1 + $0x790] sm:$0xff]
  %v269 = vld [vmem:[%s1 + $0x798] sm:$0xff]
  %v270 = vld [vmem:[%s1 + $0x7a0] sm:$0xff]
  %v271 = vld [vmem:[%s1 + $0x7a8] sm:$0xff]
  %v272 = vld [vmem:[%s1 + $0x7b0] sm:$0xff]
  %v273 = vld [vmem:[%s1 + $0x7b8] sm:$0xff]
  %v274 = vld [vmem:[%s1 + $0x7c0] sm:$0xff]
  %v275 = vld [vmem:[%s1 + $0x7c8] sm:$0xff]
  %v276 = vld [vmem:[%s1 + $0x7d0] sm:$0xff]
  %v277 = vld [vmem:[%s1 + $0x7d8] sm:$0xff]
  %v278 = vld [vmem:[%s1 + $0x7e0] sm:$0xff]
  %v279 = vld [vmem:[%s1 + $0x7e8] sm:$0xff]
  %v280 = vld [vmem:[%s1 + $0x7f0] sm:$0xff]
  %v281 = vld [vmem:[%s1 + $0x7f8] sm:$0xff]
  %v282 = vld [vmem:[%s1 + $0x800] sm:$0xff]
  %v283 = vld [vmem:[%s1 + $0x808] sm:$0xff]
  %v284 = vld [vmem:[%s1 + $0x810] sm:$0xff]
  %v285 = vld [vmem:[%s1 + $0x818] sm:$0xff]
  %v286 = vld [vmem:[%s1 + $0x820] sm:$0xff]
  %v287 = vld [vmem:[%s1 + $0x828] sm:$0xff]
  %v288 = vld [vmem:[%s1 + $0x830] sm:$0xff]
  %v289 = vld [vmem:[%s1 + $0x838] sm:$0xff]
  %v290 = vld [vmem:[%s1 + $0x840] sm:$0xff]
  %v291 = vld [vmem:[%s1 + $0x848] sm:$0xff]
  %v292 = vld [vmem:[%s1 + $0x850] sm:$0xff]
  %v293 = vld [vmem:[%s1 + $0x858] sm:$0xff]
  %v294 = vld [vmem:[%s1 + $0x860] sm:$0xff]
  %v295 = vld [vmem:[%s1 + $0x868] sm:$0xff]
  %v296 = vld [vmem:[%s1 + $0x870] sm:$0xff]
  %v297 = vld [vmem:[%s1 + $0x878] sm:$0xff]
  %v298 = vld [vmem:[%s1 + $0x880] sm:$0xff]
  %v299 = vld [vmem:[%s1 + $0x888] sm:$0xff]
  %v300 = vld [vmem:[%s1 + $0x890] sm:$0xff]
  %v301 = vld [vmem:[%s1 + $0x898] sm:$0xff]
  %v302 = vld [vmem:[%s1 + $0x8a0] sm:$0xff]
  %v303 = vld [vmem:[%s1 + $0x8a8] sm:$0xff]
  %v304 = vld [vmem:[%s1 + $0x8b0] sm:$0xff]
  %v305 = vld [vmem:[%s1 + $0x8b8] sm:$0xff]
  %v306 = vld [vmem:[%s1 + $0x8c0] sm:$0xff]
  %v307 = vld [vmem:[%s1 + $0x8c8] sm:$0xff]
  %v308 = vld [vmem:[%s1 + $0x8d0] sm:$0xff]
  %v309 = vld [vmem:[%s1 + $0x8d8] sm:$0xff]
  %v310 = vld [vmem:[%s1 + $0x8e0] sm:$0xff]
  %v311 = vld [vmem:[%s1 + $0x8e8] sm:$0xff]
  %v312 = vld [vmem:[%s1 + $0x8f0] sm:$0xff]
  %v313 = vld [vmem:[%s1 + $0x8f8] sm:$0xff]
  %v314 = vld [vmem:[%s1 + $0x900] sm:$0xff]
  %v315 = vld [vmem:[%s1 + $0x908] sm:$0xff]
  %v316 = vld [vmem:[%s1 + $0x910] sm:$0xff]
  %v317 = vld [vmem:[%s1 + $0x918] sm:$0xff]
  %v318 = vld [vmem:[%s1 + $0x920] sm:$0xff]
  %v319 = vld [vmem:[%s1 + $0x928] sm:$0xff]
  %v320 = vld [vmem:[%s1 + $0x930] sm:$0xff]
  %v321 = vld [vmem:[%s1 + $0x938] sm:$0xff]
  %v322 = vld [vmem:[%s1 + $0x940] sm:$0xff]
  %v323 = vld [vmem:[%s1 + $0x948] sm:$0xff]
  %v324 = vld [vmem:[%s1 + $0x950] sm:$0xff]
  %v325 = vld [vmem:[%s1 + $0x958] sm:$0xff]
  %v326 = vld [vmem:[%s1 + $0x960] sm:$0xff]
  %v327 = vld [vmem:[%s1 + $0x968] sm:$0xff]
  %v328 = vld [vmem:[%s1 + $0x970] sm:$0xff]
  %v329 = vld [vmem:[%s1 + $0x978] sm:$0xff]
  %v330 = vld [vmem:[%s1 + $0x980] sm:$0xff]
  %v331 = vld [vmem:[%s1 + $0x988] sm:$0xff]
  %v332 = vld [vmem:[%s1 + $0x990] sm:$0xff]
  %v333 = vld [vmem:[%s1 + $0x998] sm:$0xff]
  %v334 = vld [vmem:[%s1 + $0x9a0] sm:$0xff]
  %v335 = vld [vmem:[%s1 + $0x9a8] sm:$0xff]
  %v336 = vld [vmem:[%s1 + $0x9b0] sm:$0xff]
  %v337 = vld [vmem:[%s1 + $0x9b8] sm:$0xff]
  %v338 = vld [vmem:[%s1 + $0x9c0] sm:$0xff]
  %v339 = vld [vmem:[%s1 + $0x9c8] sm:$0xff]
  %v340 = vld [vmem:[%s1 + $0x9d0] sm:$0xff]
  %v341 = vld [vmem:[%s1 + $0x9d8] sm:$0xff]
  %v342 = vld [vmem:[%s1 + $0x9e0] sm:$0xff]
  %v343 = vld [vmem:[%s1 + $0x9e8] sm:$0xff]
  %v344 = vld [vmem:[%s1 + $0x9f0] sm:$0xff]
  %v345 = vld [vmem:[%s1 + $0x9f8] sm:$0xff]
  %v346 = vld [vmem:[%s1 + $0xa00] sm:$0xff]
  %v347 = vld [vmem:[%s1 + $0xa08] sm:$0xff]
  %v348 = vld [vmem:[%s1 + $0xa10] sm:$0xff]
  %v349 = vld [vmem:[%s1 + $0xa18] sm:$0xff]
  %v350 = vld [vmem:[%s1 + $0xa20] sm:$0xff]
  %v351 = vld [vmem:[%s1 + $0xa28] sm:$0xff]
  %v352 = vld [vmem:[%s1 + $0xa30] sm:$0xff]
  %v353 = vld [vmem:[%s1 + $0xa38] sm:$0xff]
  %v354 = vld [vmem:[%s1 + $0xa40] sm:$0xff]
  %v355 = vld [vmem:[%s1 + $0xa48] sm:$0xff]
  %v356 = vld [vmem:[%s1 + $0xa50] sm:$0xff]
  %v357 = vld [vmem:[%s1 + $0xa58] sm:$0xff]
  %v358 = vld [vmem:[%s1 + $0xa60] sm:$0xff]
  %v359 = vld [vmem:[%s1 + $0xa68] sm:$0xff]
  %v360 = vld [vmem:[%s1 + $0xa70] sm:$0xff]
  %v361 = vld [vmem:[%s1 + $0xa78] sm:$0xff]
  %v362 = vld [vmem:[%s1 + $0xa80] sm:$0xff]
  %v363 = vld [vmem:[%s1 + $0xa88] sm:$0xff]
  %v364 = vld [vmem:[%s1 + $0xa90] sm:$0xff]
  %v365 = vld [vmem:[%s1 + $0xa98] sm:$0xff]
  %v366 = vld [vmem:[%s1 + $0xaa0] sm:$0xff]
  %v367 = vld [vmem:[%s1 + $0xaa8] sm:$0xff]
  %v368 = vld [vmem:[%s1 + $0xab0] sm:$0xff]
  %v369 = vld [vmem:[%s1 + $0xab8] sm:$0xff]
  %v370 = vld [vmem:[%s1 + $0xac0] sm:$0xff]
  %v371 = vld [vmem:[%s1 + $0xac8] sm:$0xff]
  %v372 = vld [vmem:[%s1 + $0xad0] sm:$0xff]
  %v373 = vld [vmem:[%s1 + $0xad8] sm:$0xff]
  %v374 = vld [vmem:[%s1 + $0xae0] sm:$0xff]
  %v375 = vld [vmem:[%s1 + $0xae8] sm:$0xff]
  %v376 = vld [vmem:[%s1 + $0xaf0] sm:$0xff]
  %v377 = vld [vmem:[%s1 + $0xaf8] sm:$0xff]
  %v378 = vld [vmem:[%s1 + $0xb00] sm:$0xff]
  %v379 = vld [vmem:[%s1 + $0xb08] sm:$0xff]
  %v380 = vld [vmem:[%s1 + $0xb10] sm:$0xff]
  %v381 = vld [vmem:[%s1 + $0xb18] sm:$0xff]
  %v382 = vld [vmem:[%s1 + $0xb20] sm:$0xff]
  %v383 = vld [vmem:[%s1 + $0xb28] sm:$0xff]
  %v384 = vld [vmem:[%s1 + $0xb30] sm:$0xff]
  %v385 = vld [vmem:[%s1 + $0xb38] sm:$0xff]
  %v386 = vld [vmem:[%s1 + $0xb40] sm:$0xff]
  %v387 = vld [vmem:[%s1 + $0xb48] sm:$0xff]
  %v388 = vld [vmem:[%s1 + $0xb50] sm:$0xff]
  %v389 = vld [vmem:[%s1 + $0xb58] sm:$0xff]
  %v390 = vld [vmem:[%s1 + $0xb60] sm:$0xff]
  %v391 = vld [vmem:[%s1 + $0xb68] sm:$0xff]
  %v392 = vld [vmem:[%s1 + $0xb70] sm:$0xff]
  %v393 = vld [vmem:[%s1 + $0xb78] sm:$0xff]
  %v394 = vld [vmem:[%s1 + $0xb80] sm:$0xff]
  %v395 = vld [vmem:[%s1 + $0xb88] sm:$0xff]
  %v396 = vld [vmem:[%s1 + $0xb90] sm:$0xff]
  %v397 = vld [vmem:[%s1 + $0xb98] sm:$0xff]
  %v398 = vld [vmem:[%s1 + $0xba0] sm:$0xff]
  %v399 = vld [vmem:[%s1 + $0xba8] sm:$0xff]
  %v400 = vld [vmem:[%s1 + $0xbb0] sm:$0xff]
  %v401 = vld [vmem:[%s1 + $0xbb8] sm:$0xff]
  %v402 = vld [vmem:[%s1 + $0xbc0] sm:$0xff]
  %v403 = vld [vmem:[%s1 + $0xbc8] sm:$0xff]
  %v404 = vld [vmem:[%s1 + $0xbd0] sm:$0xff]
  %v405 = vld [vmem:[%s1 + $0xbd8] sm:$0xff]
  %v406 = vld [vmem:[%s1 + $0xbe0] sm:$0xff]
  %v407 = vld [vmem:[%s1 + $0xbe8] sm:$0xff]
  %v408 = vld [vmem:[%s1 + $0xbf0] sm:$0xff]
  %v409 = vld [vmem:[%s1 + $0xbf8] sm:$0xff]
  %v410 = vld [vmem:[%s1 + $0xc00] sm:$0xff]
  %v411 = vld [vmem:[%s1 + $0xc08] sm:$0xff]
  %v412 = vld [vmem:[%s1 + $0xc10] sm:$0xff]
  %v413 = vld [vmem:[%s1 + $0xc18] sm:$0xff]
  %v414 = vld [vmem:[%s1 + $0xc20] sm:$0xff]
  %v415 = vld [vmem:[%s1 + $0xc28] sm:$0xff]
  %v416 = vld [vmem:[%s1 + $0xc30] sm:$0xff]
  %v417 = vld [vmem:[%s1 + $0xc38] sm:$0xff]
  %v810 = vunpack.c.l.b16 %v26
  %v811 = vunpack.c.h.b16 %v26
  %v812 = vunpack.c.l.b16 %v27
  %v813 = vunpack.c.h.b16 %v27
  %v814 = vunpack.c.l.b16 %v28
  %v815 = vunpack.c.h.b16 %v28
  %v816 = vunpack.c.l.b16 %v29
  %v817 = vunpack.c.h.b16 %v29
  %v818 = vunpack.c.l.b16 %v30
  %v819 = vunpack.c.h.b16 %v30
  %v820 = vunpack.c.l.b16 %v31
  %v821 = vunpack.c.h.b16 %v31
  %v822 = vunpack.c.l.b16 %v32
  %v823 = vunpack.c.h.b16 %v32
  %v824 = vunpack.c.l.b16 %v33
  %v825 = vunpack.c.h.b16 %v33
  %v826 = vunpack.c.l.b16 %v34
  %v827 = vunpack.c.h.b16 %v34
  %v828 = vunpack.c.l.b16 %v35
  %v829 = vunpack.c.h.b16 %v35
  %v830 = vunpack.c.l.b16 %v36
  %v831 = vunpack.c.h.b16 %v36
  %v832 = vunpack.c.l.b16 %v37
  %v833 = vunpack.c.h.b16 %v37
  %v834 = vunpack.c.l.b16 %v38
  %v835 = vunpack.c.h.b16 %v38
  %v836 = vunpack.c.l.b16 %v39
  %v837 = vunpack.c.h.b16 %v39
  %v838 = vunpack.c.l.b16 %v40
  %v839 = vunpack.c.h.b16 %v40
  %v840 = vunpack.c.l.b16 %v41
  %v841 = vunpack.c.h.b16 %v41
  %v842 = vunpack.c.l.b16 %v42
  %v843 = vunpack.c.h.b16 %v42
  %v844 = vunpack.c.l.b16 %v43
  %v845 = vunpack.c.h.b16 %v43
  %v846 = vunpack.c.l.b16 %v44
  %v847 = vunpack.c.h.b16 %v44
  %v848 = vunpack.c.l.b16 %v45
  %v849 = vunpack.c.h.b16 %v45
  %v850 = vunpack.c.l.b16 %v46
  %v851 = vunpack.c.h.b16 %v46
  %v852 = vunpack.c.l.b16 %v47
  %v853 = vunpack.c.h.b16 %v47
  %v854 = vunpack.c.l.b16 %v48
  %v855 = vunpack.c.h.b16 %v48
  %v856 = vunpack.c.l.b16 %v49
  %v857 = vunpack.c.h.b16 %v49
  %v858 = vunpack.c.l.b16 %v50
  %v859 = vunpack.c.h.b16 %v50
  %v860 = vunpack.c.l.b16 %v51
  %v861 = vunpack.c.h.b16 %v51
  %v862 = vunpack.c.l.b16 %v52
  %v863 = vunpack.c.h.b16 %v52
  %v864 = vunpack.c.l.b16 %v53
  %v865 = vunpack.c.h.b16 %v53
  %v866 = vunpack.c.l.b16 %v54
  %v867 = vunpack.c.h.b16 %v54
  %v868 = vunpack.c.l.b16 %v55
  %v869 = vunpack.c.h.b16 %v55
  %v870 = vunpack.c.l.b16 %v56
  %v871 = vunpack.c.h.b16 %v56
  %v872 = vunpack.c.l.b16 %v57
  %v873 = vunpack.c.h.b16 %v57
  %v874 = vunpack.c.l.b16 %v58
  %v875 = vunpack.c.h.b16 %v58
  %v876 = vunpack.c.l.b16 %v59
  %v877 = vunpack.c.h.b16 %v59
  %v878 = vunpack.c.l.b16 %v60
  %v879 = vunpack.c.h.b16 %v60
  %v880 = vunpack.c.l.b16 %v61
  %v881 = vunpack.c.h.b16 %v61
  %v882 = vunpack.c.l.b16 %v62
  %v883 = vunpack.c.h.b16 %v62
  %v884 = vunpack.c.l.b16 %v63
  %v885 = vunpack.c.h.b16 %v63
  %v886 = vunpack.c.l.b16 %v64
  %v887 = vunpack.c.h.b16 %v64
  %v888 = vunpack.c.l.b16 %v65
  %v889 = vunpack.c.h.b16 %v65
  %v890 = vunpack.c.l.b16 %v66
  %v891 = vunpack.c.h.b16 %v66
  %v892 = vunpack.c.l.b16 %v67
  %v893 = vunpack.c.h.b16 %v67
  %v894 = vunpack.c.l.b16 %v68
  %v895 = vunpack.c.h.b16 %v68
  %v896 = vunpack.c.l.b16 %v69
  %v897 = vunpack.c.h.b16 %v69
  %v898 = vunpack.c.l.b16 %v70
  %v899 = vunpack.c.h.b16 %v70
  %v900 = vunpack.c.l.b16 %v71
  %v901 = vunpack.c.h.b16 %v71
  %v902 = vunpack.c.l.b16 %v72
  %v903 = vunpack.c.h.b16 %v72
  %v904 = vunpack.c.l.b16 %v73
  %v905 = vunpack.c.h.b16 %v73
  %v906 = vunpack.c.l.b16 %v74
  %v907 = vunpack.c.h.b16 %v74
  %v908 = vunpack.c.l.b16 %v75
  %v909 = vunpack.c.h.b16 %v75
  %v910 = vunpack.c.l.b16 %v76
  %v911 = vunpack.c.h.b16 %v76
  %v912 = vunpack.c.l.b16 %v77
  %v913 = vunpack.c.h.b16 %v77
  %v914 = vunpack.c.l.b16 %v78
  %v915 = vunpack.c.h.b16 %v78
  %v916 = vunpack.c.l.b16 %v79
  %v917 = vunpack.c.h.b16 %v79
  %v918 = vunpack.c.l.b16 %v80
  %v919 = vunpack.c.h.b16 %v80
  %v920 = vunpack.c.l.b16 %v81
  %v921 = vunpack.c.h.b16 %v81
  %v922 = vunpack.c.l.b16 %v82
  %v923 = vunpack.c.h.b16 %v82
  %v924 = vunpack.c.l.b16 %v83
  %v925 = vunpack.c.h.b16 %v83
  %v926 = vunpack.c.l.b16 %v84
  %v927 = vunpack.c.h.b16 %v84
  %v928 = vunpack.c.l.b16 %v85
  %v929 = vunpack.c.h.b16 %v85
  %v930 = vunpack.c.l.b16 %v86
  %v931 = vunpack.c.h.b16 %v86
  %v932 = vunpack.c.l.b16 %v87
  %v933 = vunpack.c.h.b16 %v87
  %v934 = vunpack.c.l.b16 %v88
  %v935 = vunpack.c.h.b16 %v88
  %v936 = vunpack.c.l.b16 %v89
  %v937 = vunpack.c.h.b16 %v89
  %v938 = vunpack.c.l.b16 %v90
  %v939 = vunpack.c.h.b16 %v90
  %v940 = vunpack.c.l.b16 %v91
  %v941 = vunpack.c.h.b16 %v91
  %v942 = vunpack.c.l.b16 %v92
  %v943 = vunpack.c.h.b16 %v92
  %v944 = vunpack.c.l.b16 %v93
  %v945 = vunpack.c.h.b16 %v93
  %v946 = vunpack.c.l.b16 %v94
  %v947 = vunpack.c.h.b16 %v94
  %v948 = vunpack.c.l.b16 %v95
  %v949 = vunpack.c.h.b16 %v95
  %v950 = vunpack.c.l.b16 %v96
  %v951 = vunpack.c.h.b16 %v96
  %v952 = vunpack.c.l.b16 %v97
  %v953 = vunpack.c.h.b16 %v97
  %v954 = vunpack.c.l.b16 %v98
  %v955 = vunpack.c.h.b16 %v98
  %v956 = vunpack.c.l.b16 %v99
  %v957 = vunpack.c.h.b16 %v99
  %v958 = vunpack.c.l.b16 %v100
  %v959 = vunpack.c.h.b16 %v100
  %v960 = vunpack.c.l.b16 %v101
  %v961 = vunpack.c.h.b16 %v101
  %v962 = vunpack.c.l.b16 %v102
  %v963 = vunpack.c.h.b16 %v102
  %v964 = vunpack.c.l.b16 %v103
  %v965 = vunpack.c.h.b16 %v103
  %v966 = vunpack.c.l.b16 %v104
  %v967 = vunpack.c.h.b16 %v104
  %v968 = vunpack.c.l.b16 %v105
  %v969 = vunpack.c.h.b16 %v105
  %v970 = vunpack.c.l.b16 %v106
  %v971 = vunpack.c.h.b16 %v106
  %v972 = vunpack.c.l.b16 %v107
  %v973 = vunpack.c.h.b16 %v107
  %v974 = vunpack.c.l.b16 %v108
  %v975 = vunpack.c.h.b16 %v108
  %v976 = vunpack.c.l.b16 %v109
  %v977 = vunpack.c.h.b16 %v109
  %v978 = vunpack.c.l.b16 %v110
  %v979 = vunpack.c.h.b16 %v110
  %v980 = vunpack.c.l.b16 %v111
  %v981 = vunpack.c.h.b16 %v111
  %v982 = vunpack.c.l.b16 %v112
  %v983 = vunpack.c.h.b16 %v112
  %v984 = vunpack.c.l.b16 %v113
  %v985 = vunpack.c.h.b16 %v113
  %v986 = vunpack.c.l.b16 %v114
  %v987 = vunpack.c.h.b16 %v114
  %v988 = vunpack.c.l.b16 %v115
  %v989 = vunpack.c.h.b16 %v115
  %v990 = vunpack.c.l.b16 %v116
  %v991 = vunpack.c.h.b16 %v116
  %v992 = vunpack.c.l.b16 %v117
  %v993 = vunpack.c.h.b16 %v117
  %v994 = vunpack.c.l.b16 %v118
  %v995 = vunpack.c.h.b16 %v118
  %v996 = vunpack.c.l.b16 %v119
  %v997 = vunpack.c.h.b16 %v119
  %v998 = vunpack.c.l.b16 %v120
  %v999 = vunpack.c.h.b16 %v120
  %v1000 = vunpack.c.l.b16 %v121
  %v1001 = vunpack.c.h.b16 %v121
  %v1002 = vunpack.c.l.b16 %v122
  %v1003 = vunpack.c.h.b16 %v122
  %v1004 = vunpack.c.l.b16 %v123
  %v1005 = vunpack.c.h.b16 %v123
  %v1006 = vunpack.c.l.b16 %v124
  %v1007 = vunpack.c.h.b16 %v124
  %v1008 = vunpack.c.l.b16 %v125
  %v1009 = vunpack.c.h.b16 %v125
  %v1010 = vunpack.c.l.b16 %v126
  %v1011 = vunpack.c.h.b16 %v126
  %v1012 = vunpack.c.l.b16 %v127
  %v1013 = vunpack.c.h.b16 %v127
  %v1014 = vunpack.c.l.b16 %v128
  %v1015 = vunpack.c.h.b16 %v128
  %v1016 = vunpack.c.l.b16 %v129
  %v1017 = vunpack.c.h.b16 %v129
  %v1018 = vunpack.c.l.b16 %v130
  %v1019 = vunpack.c.h.b16 %v130
  %v1020 = vunpack.c.l.b16 %v131
  %v1021 = vunpack.c.h.b16 %v131
  %v1022 = vunpack.c.l.b16 %v132
  %v1023 = vunpack.c.h.b16 %v132
  %v1024 = vunpack.c.l.b16 %v133
  %v1025 = vunpack.c.h.b16 %v133
  %v1026 = vunpack.c.l.b16 %v134
  %v1027 = vunpack.c.h.b16 %v134
  %v1028 = vunpack.c.l.b16 %v135
  %v1029 = vunpack.c.h.b16 %v135
  %v1030 = vunpack.c.l.b16 %v136
  %v1031 = vunpack.c.h.b16 %v136
  %v1032 = vunpack.c.l.b16 %v137
  %v1033 = vunpack.c.h.b16 %v137
  %v1034 = vunpack.c.l.b16 %v138
  %v1035 = vunpack.c.h.b16 %v138
  %v1036 = vunpack.c.l.b16 %v139
  %v1037 = vunpack.c.h.b16 %v139
  %v1038 = vunpack.c.l.b16 %v140
  %v1039 = vunpack.c.h.b16 %v140
  %v1040 = vunpack.c.l.b16 %v141
  %v1041 = vunpack.c.h.b16 %v141
  %v1042 = vunpack.c.l.b16 %v142
  %v1043 = vunpack.c.h.b16 %v142
  %v1044 = vunpack.c.l.b16 %v143
  %v1045 = vunpack.c.h.b16 %v143
  %v1046 = vunpack.c.l.b16 %v144
  %v1047 = vunpack.c.h.b16 %v144
  %v1048 = vunpack.c.l.b16 %v145
  %v1049 = vunpack.c.h.b16 %v145
  %v1050 = vunpack.c.l.b16 %v146
  %v1051 = vunpack.c.h.b16 %v146
  %v1052 = vunpack.c.l.b16 %v147
  %v1053 = vunpack.c.h.b16 %v147
  %v1054 = vunpack.c.l.b16 %v148
  %v1055 = vunpack.c.h.b16 %v148
  %v1056 = vunpack.c.l.b16 %v149
  %v1057 = vunpack.c.h.b16 %v149
  %v1058 = vunpack.c.l.b16 %v150
  %v1059 = vunpack.c.h.b16 %v150
  %v1060 = vunpack.c.l.b16 %v151
  %v1061 = vunpack.c.h.b16 %v151
  %v1062 = vunpack.c.l.b16 %v152
  %v1063 = vunpack.c.h.b16 %v152
  %v1064 = vunpack.c.l.b16 %v153
  %v1065 = vunpack.c.h.b16 %v153
  %v1066 = vunpack.c.l.b16 %v154
  %v1067 = vunpack.c.h.b16 %v154
  %v1068 = vunpack.c.l.b16 %v155
  %v1069 = vunpack.c.h.b16 %v155
  %v1070 = vunpack.c.l.b16 %v156
  %v1071 = vunpack.c.h.b16 %v156
  %v1072 = vunpack.c.l.b16 %v157
  %v1073 = vunpack.c.h.b16 %v157
  %v1074 = vunpack.c.l.b16 %v158
  %v1075 = vunpack.c.h.b16 %v158
  %v1076 = vunpack.c.l.b16 %v159
  %v1077 = vunpack.c.h.b16 %v159
  %v1078 = vunpack.c.l.b16 %v160
  %v1079 = vunpack.c.h.b16 %v160
  %v1080 = vunpack.c.l.b16 %v161
  %v1081 = vunpack.c.h.b16 %v161
  %v1082 = vunpack.c.l.b16 %v162
  %v1083 = vunpack.c.h.b16 %v162
  %v1084 = vunpack.c.l.b16 %v163
  %v1085 = vunpack.c.h.b16 %v163
  %v1086 = vunpack.c.l.b16 %v164
  %v1087 = vunpack.c.h.b16 %v164
  %v1088 = vunpack.c.l.b16 %v165
  %v1089 = vunpack.c.h.b16 %v165
  %v1090 = vunpack.c.l.b16 %v166
  %v1091 = vunpack.c.h.b16 %v166
  %v1092 = vunpack.c.l.b16 %v167
  %v1093 = vunpack.c.h.b16 %v167
  %v1094 = vunpack.c.l.b16 %v168
  %v1095 = vunpack.c.h.b16 %v168
  %v1096 = vunpack.c.l.b16 %v169
  %v1097 = vunpack.c.h.b16 %v169
  %v1098 = vunpack.c.l.b16 %v170
  %v1099 = vunpack.c.h.b16 %v170
  %v1100 = vunpack.c.l.b16 %v171
  %v1101 = vunpack.c.h.b16 %v171
  %v1102 = vunpack.c.l.b16 %v172
  %v1103 = vunpack.c.h.b16 %v172
  %v1104 = vunpack.c.l.b16 %v173
  %v1105 = vunpack.c.h.b16 %v173
  %v1106 = vunpack.c.l.b16 %v174
  %v1107 = vunpack.c.h.b16 %v174
  %v1108 = vunpack.c.l.b16 %v175
  %v1109 = vunpack.c.h.b16 %v175
  %v1110 = vunpack.c.l.b16 %v176
  %v1111 = vunpack.c.h.b16 %v176
  %v1112 = vunpack.c.l.b16 %v177
  %v1113 = vunpack.c.h.b16 %v177
  %v1114 = vunpack.c.l.b16 %v178
  %v1115 = vunpack.c.h.b16 %v178
  %v1116 = vunpack.c.l.b16 %v179
  %v1117 = vunpack.c.h.b16 %v179
  %v1118 = vunpack.c.l.b16 %v180
  %v1119 = vunpack.c.h.b16 %v180
  %v1120 = vunpack.c.l.b16 %v181
  %v1121 = vunpack.c.h.b16 %v181
  %v1122 = vunpack.c.l.b16 %v182
  %v1123 = vunpack.c.h.b16 %v182
  %v1124 = vunpack.c.l.b16 %v183
  %v1125 = vunpack.c.h.b16 %v183
  %v1126 = vunpack.c.l.b16 %v184
  %v1127 = vunpack.c.h.b16 %v184
  %v1128 = vunpack.c.l.b16 %v185
  %v1129 = vunpack.c.h.b16 %v185
  %v1130 = vunpack.c.l.b16 %v186
  %v1131 = vunpack.c.h.b16 %v186
  %v1132 = vunpack.c.l.b16 %v187
  %v1133 = vunpack.c.h.b16 %v187
  %v1134 = vunpack.c.l.b16 %v188
  %v1135 = vunpack.c.h.b16 %v188
  %v1136 = vunpack.c.l.b16 %v189
  %v1137 = vunpack.c.h.b16 %v189
  %v1138 = vunpack.c.l.b16 %v190
  %v1139 = vunpack.c.h.b16 %v190
  %v1140 = vunpack.c.l.b16 %v191
  %v1141 = vunpack.c.h.b16 %v191
  %v1142 = vunpack.c.l.b16 %v192
  %v1143 = vunpack.c.h.b16 %v192
  %v1144 = vunpack.c.l.b16 %v193
  %v1145 = vunpack.c.h.b16 %v193
  %v1146 = vunpack.c.l.b16 %v194
  %v1147 = vunpack.c.h.b16 %v194
  %v1148 = vunpack.c.l.b16 %v195
  %v1149 = vunpack.c.h.b16 %v195
  %v1150 = vunpack.c.l.b16 %v196
  %v1151 = vunpack.c.h.b16 %v196
  %v1152 = vunpack.c.l.b16 %v197
  %v1153 = vunpack.c.h.b16 %v197
  %v1154 = vunpack.c.l.b16 %v198
  %v1155 = vunpack.c.h.b16 %v198
  %v1156 = vunpack.c.l.b16 %v199
  %v1157 = vunpack.c.h.b16 %v199
  %v1158 = vunpack.c.l.b16 %v200
  %v1159 = vunpack.c.h.b16 %v200
  %v1160 = vunpack.c.l.b16 %v201
  %v1161 = vunpack.c.h.b16 %v201
  %v1162 = vunpack.c.l.b16 %v202
  %v1163 = vunpack.c.h.b16 %v202
  %v1164 = vunpack.c.l.b16 %v203
  %v1165 = vunpack.c.h.b16 %v203
  %v1166 = vunpack.c.l.b16 %v204
  %v1167 = vunpack.c.h.b16 %v204
  %v1168 = vunpack.c.l.b16 %v205
  %v1169 = vunpack.c.h.b16 %v205
  %v1170 = vunpack.c.l.b16 %v206
  %v1171 = vunpack.c.h.b16 %v206
  %v1172 = vunpack.c.l.b16 %v207
  %v1173 = vunpack.c.h.b16 %v207
  %v1174 = vunpack.c.l.b16 %v208
  %v1175 = vunpack.c.h.b16 %v208
  %v1176 = vunpack.c.l.b16 %v209
  %v1177 = vunpack.c.h.b16 %v209
  %v1178 = vunpack.c.l.b16 %v210
  %v1179 = vunpack.c.h.b16 %v210
  %v1180 = vunpack.c.l.b16 %v211
  %v1181 = vunpack.c.h.b16 %v211
  %v1182 = vunpack.c.l.b16 %v212
  %v1183 = vunpack.c.h.b16 %v212
  %v1184 = vunpack.c.l.b16 %v213
  %v1185 = vunpack.c.h.b16 %v213
  %v1186 = vunpack.c.l.b16 %v214
  %v1187 = vunpack.c.h.b16 %v214
  %v1188 = vunpack.c.l.b16 %v215
  %v1189 = vunpack.c.h.b16 %v215
  %v1190 = vunpack.c.l.b16 %v216
  %v1191 = vunpack.c.h.b16 %v216
  %v1192 = vunpack.c.l.b16 %v217
  %v1193 = vunpack.c.h.b16 %v217
  %v1194 = vunpack.c.l.b16 %v218
  %v1195 = vunpack.c.h.b16 %v218
  %v1196 = vunpack.c.l.b16 %v219
  %v1197 = vunpack.c.h.b16 %v219
  %v1198 = vunpack.c.l.b16 %v220
  %v1199 = vunpack.c.h.b16 %v220
  %v1200 = vunpack.c.l.b16 %v221
  %v1201 = vunpack.c.h.b16 %v221
  %v1202 = vunpack.c.l.b16 %v222
  %v1203 = vunpack.c.h.b16 %v222
  %v1204 = vunpack.c.l.b16 %v223
  %v1205 = vunpack.c.h.b16 %v223
  %v1206 = vunpack.c.l.b16 %v224
  %v1207 = vunpack.c.h.b16 %v224
  %v1208 = vunpack.c.l.b16 %v225
  %v1209 = vunpack.c.h.b16 %v225
  %v1210 = vunpack.c.l.b16 %v226
  %v1211 = vunpack.c.h.b16 %v226
  %v1212 = vunpack.c.l.b16 %v227
  %v1213 = vunpack.c.h.b16 %v227
  %v1214 = vunpack.c.l.b16 %v228
  %v1215 = vunpack.c.h.b16 %v228
  %v1216 = vunpack.c.l.b16 %v229
  %v1217 = vunpack.c.h.b16 %v229
  %v1218 = vunpack.c.l.b16 %v230
  %v1219 = vunpack.c.h.b16 %v230
  %v1220 = vunpack.c.l.b16 %v231
  %v1221 = vunpack.c.h.b16 %v231
  %v1222 = vunpack.c.l.b16 %v232
  %v1223 = vunpack.c.h.b16 %v232
  %v1224 = vunpack.c.l.b16 %v233
  %v1225 = vunpack.c.h.b16 %v233
  %v1226 = vunpack.c.l.b16 %v234
  %v1227 = vunpack.c.h.b16 %v234
  %v1228 = vunpack.c.l.b16 %v235
  %v1229 = vunpack.c.h.b16 %v235
  %v1230 = vunpack.c.l.b16 %v236
  %v1231 = vunpack.c.h.b16 %v236
  %v1232 = vunpack.c.l.b16 %v237
  %v1233 = vunpack.c.h.b16 %v237
  %v1234 = vunpack.c.l.b16 %v238
  %v1235 = vunpack.c.h.b16 %v238
  %v1236 = vunpack.c.l.b16 %v239
  %v1237 = vunpack.c.h.b16 %v239
  %v1238 = vunpack.c.l.b16 %v240
  %v1239 = vunpack.c.h.b16 %v240
  %v1240 = vunpack.c.l.b16 %v241
  %v1241 = vunpack.c.h.b16 %v241
  %v1242 = vunpack.c.l.b16 %v242
  %v1243 = vunpack.c.h.b16 %v242
  %v1244 = vunpack.c.l.b16 %v243
  %v1245 = vunpack.c.h.b16 %v243
  %v1246 = vunpack.c.l.b16 %v244
  %v1247 = vunpack.c.h.b16 %v244
  %v1248 = vunpack.c.l.b16 %v245
  %v1249 = vunpack.c.h.b16 %v245
  %v1250 = vunpack.c.l.b16 %v246
  %v1251 = vunpack.c.h.b16 %v246
  %v1252 = vunpack.c.l.b16 %v247
  %v1253 = vunpack.c.h.b16 %v247
  %v1254 = vunpack.c.l.b16 %v248
  %v1255 = vunpack.c.h.b16 %v248
  %v1256 = vunpack.c.l.b16 %v249
  %v1257 = vunpack.c.h.b16 %v249
  %v1258 = vunpack.c.l.b16 %v250
  %v1259 = vunpack.c.h.b16 %v250
  %v1260 = vunpack.c.l.b16 %v251
  %v1261 = vunpack.c.h.b16 %v251
  %v1262 = vunpack.c.l.b16 %v252
  %v1263 = vunpack.c.h.b16 %v252
  %v1264 = vunpack.c.l.b16 %v253
  %v1265 = vunpack.c.h.b16 %v253
  %v1266 = vunpack.c.l.b16 %v254
  %v1267 = vunpack.c.h.b16 %v254
  %v1268 = vunpack.c.l.b16 %v255
  %v1269 = vunpack.c.h.b16 %v255
  %v1270 = vunpack.c.l.b16 %v256
  %v1271 = vunpack.c.h.b16 %v256
  %v1272 = vunpack.c.l.b16 %v257
  %v1273 = vunpack.c.h.b16 %v257
  %v1274 = vunpack.c.l.b16 %v258
  %v1275 = vunpack.c.h.b16 %v258
  %v1276 = vunpack.c.l.b16 %v259
  %v1277 = vunpack.c.h.b16 %v259
  %v1278 = vunpack.c.l.b16 %v260
  %v1279 = vunpack.c.h.b16 %v260
  %v1280 = vunpack.c.l.b16 %v261
  %v1281 = vunpack.c.h.b16 %v261
  %v1282 = vunpack.c.l.b16 %v262
  %v1283 = vunpack.c.h.b16 %v262
  %v1284 = vunpack.c.l.b16 %v263
  %v1285 = vunpack.c.h.b16 %v263
  %v1286 = vunpack.c.l.b16 %v264
  %v1287 = vunpack.c.h.b16 %v264
  %v1288 = vunpack.c.l.b16 %v265
  %v1289 = vunpack.c.h.b16 %v265
  %v1290 = vunpack.c.l.b16 %v266
  %v1291 = vunpack.c.h.b16 %v266
  %v1292 = vunpack.c.l.b16 %v267
  %v1293 = vunpack.c.h.b16 %v267
  %v1294 = vunpack.c.l.b16 %v268
  %v1295 = vunpack.c.h.b16 %v268
  %v1296 = vunpack.c.l.b16 %v269
  %v1297 = vunpack.c.h.b16 %v269
  %v1298 = vunpack.c.l.b16 %v270
  %v1299 = vunpack.c.h.b16 %v270
  %v1300 = vunpack.c.l.b16 %v271
  %v1301 = vunpack.c.h.b16 %v271
  %v1302 = vunpack.c.l.b16 %v272
  %v1303 = vunpack.c.h.b16 %v272
  %v1304 = vunpack.c.l.b16 %v273
  %v1305 = vunpack.c.h.b16 %v273
  %v1306 = vunpack.c.l.b16 %v274
  %v1307 = vunpack.c.h.b16 %v274
  %v1308 = vunpack.c.l.b16 %v275
  %v1309 = vunpack.c.h.b16 %v275
  %v1310 = vunpack.c.l.b16 %v276
  %v1311 = vunpack.c.h.b16 %v276
  %v1312 = vunpack.c.l.b16 %v277
  %v1313 = vunpack.c.h.b16 %v277
  %v1314 = vunpack.c.l.b16 %v278
  %v1315 = vunpack.c.h.b16 %v278
  %v1316 = vunpack.c.l.b16 %v279
  %v1317 = vunpack.c.h.b16 %v279
  %v1318 = vunpack.c.l.b16 %v280
  %v1319 = vunpack.c.h.b16 %v280
  %v1320 = vunpack.c.l.b16 %v281
  %v1321 = vunpack.c.h.b16 %v281
  %v1322 = vunpack.c.l.b16 %v282
  %v1323 = vunpack.c.h.b16 %v282
  %v1324 = vunpack.c.l.b16 %v283
  %v1325 = vunpack.c.h.b16 %v283
  %v1326 = vunpack.c.l.b16 %v284
  %v1327 = vunpack.c.h.b16 %v284
  %v1328 = vunpack.c.l.b16 %v285
  %v1329 = vunpack.c.h.b16 %v285
  %v1330 = vunpack.c.l.b16 %v286
  %v1331 = vunpack.c.h.b16 %v286
  %v1332 = vunpack.c.l.b16 %v287
  %v1333 = vunpack.c.h.b16 %v287
  %v1334 = vunpack.c.l.b16 %v288
  %v1335 = vunpack.c.h.b16 %v288
  %v1336 = vunpack.c.l.b16 %v289
  %v1337 = vunpack.c.h.b16 %v289
  %v1338 = vunpack.c.l.b16 %v290
  %v1339 = vunpack.c.h.b16 %v290
  %v1340 = vunpack.c.l.b16 %v291
  %v1341 = vunpack.c.h.b16 %v291
  %v1342 = vunpack.c.l.b16 %v292
  %v1343 = vunpack.c.h.b16 %v292
  %v1344 = vunpack.c.l.b16 %v293
  %v1345 = vunpack.c.h.b16 %v293
  %v1346 = vunpack.c.l.b16 %v294
  %v1347 = vunpack.c.h.b16 %v294
  %v1348 = vunpack.c.l.b16 %v295
  %v1349 = vunpack.c.h.b16 %v295
  %v1350 = vunpack.c.l.b16 %v296
  %v1351 = vunpack.c.h.b16 %v296
  %v1352 = vunpack.c.l.b16 %v297
  %v1353 = vunpack.c.h.b16 %v297
  %v1354 = vunpack.c.l.b16 %v298
  %v1355 = vunpack.c.h.b16 %v298
  %v1356 = vunpack.c.l.b16 %v299
  %v1357 = vunpack.c.h.b16 %v299
  %v1358 = vunpack.c.l.b16 %v300
  %v1359 = vunpack.c.h.b16 %v300
  %v1360 = vunpack.c.l.b16 %v301
  %v1361 = vunpack.c.h.b16 %v301
  %v1362 = vunpack.c.l.b16 %v302
  %v1363 = vunpack.c.h.b16 %v302
  %v1364 = vunpack.c.l.b16 %v303
  %v1365 = vunpack.c.h.b16 %v303
  %v1366 = vunpack.c.l.b16 %v304
  %v1367 = vunpack.c.h.b16 %v304
  %v1368 = vunpack.c.l.b16 %v305
  %v1369 = vunpack.c.h.b16 %v305
  %v1370 = vunpack.c.l.b16 %v306
  %v1371 = vunpack.c.h.b16 %v306
  %v1372 = vunpack.c.l.b16 %v307
  %v1373 = vunpack.c.h.b16 %v307
  %v1374 = vunpack.c.l.b16 %v308
  %v1375 = vunpack.c.h.b16 %v308
  %v1376 = vunpack.c.l.b16 %v309
  %v1377 = vunpack.c.h.b16 %v309
  %v1378 = vunpack.c.l.b16 %v310
  %v1379 = vunpack.c.h.b16 %v310
  %v1380 = vunpack.c.l.b16 %v311
  %v1381 = vunpack.c.h.b16 %v311
  %v1382 = vunpack.c.l.b16 %v312
  %v1383 = vunpack.c.h.b16 %v312
  %v1384 = vunpack.c.l.b16 %v313
  %v1385 = vunpack.c.h.b16 %v313
  %v1386 = vunpack.c.l.b16 %v314
  %v1387 = vunpack.c.h.b16 %v314
  %v1388 = vunpack.c.l.b16 %v315
  %v1389 = vunpack.c.h.b16 %v315
  %v1390 = vunpack.c.l.b16 %v316
  %v1391 = vunpack.c.h.b16 %v316
  %v1392 = vunpack.c.l.b16 %v317
  %v1393 = vunpack.c.h.b16 %v317
  %v1394 = vunpack.c.l.b16 %v318
  %v1395 = vunpack.c.h.b16 %v318
  %v1396 = vunpack.c.l.b16 %v319
  %v1397 = vunpack.c.h.b16 %v319
  %v1398 = vunpack.c.l.b16 %v320
  %v1399 = vunpack.c.h.b16 %v320
  %v1400 = vunpack.c.l.b16 %v321
  %v1401 = vunpack.c.h.b16 %v321
  %v1402 = vunpack.c.l.b16 %v322
  %v1403 = vunpack.c.h.b16 %v322
  %v1404 = vunpack.c.l.b16 %v323
  %v1405 = vunpack.c.h.b16 %v323
  %v1406 = vunpack.c.l.b16 %v324
  %v1407 = vunpack.c.h.b16 %v324
  %v1408 = vunpack.c.l.b16 %v325
  %v1409 = vunpack.c.h.b16 %v325
  %v1410 = vunpack.c.l.b16 %v326
  %v1411 = vunpack.c.h.b16 %v326
  %v1412 = vunpack.c.l.b16 %v327
  %v1413 = vunpack.c.h.b16 %v327
  %v1414 = vunpack.c.l.b16 %v328
  %v1415 = vunpack.c.h.b16 %v328
  %v1416 = vunpack.c.l.b16 %v329
  %v1417 = vunpack.c.h.b16 %v329
  %v1418 = vunpack.c.l.b16 %v330
  %v1419 = vunpack.c.h.b16 %v330
  %v1420 = vunpack.c.l.b16 %v331
  %v1421 = vunpack.c.h.b16 %v331
  %v1422 = vunpack.c.l.b16 %v332
  %v1423 = vunpack.c.h.b16 %v332
  %v1424 = vunpack.c.l.b16 %v333
  %v1425 = vunpack.c.h.b16 %v333
  %v1426 = vunpack.c.l.b16 %v334
  %v1427 = vunpack.c.h.b16 %v334
  %v1428 = vunpack.c.l.b16 %v335
  %v1429 = vunpack.c.h.b16 %v335
  %v1430 = vunpack.c.l.b16 %v336
  %v1431 = vunpack.c.h.b16 %v336
  %v1432 = vunpack.c.l.b16 %v337
  %v1433 = vunpack.c.h.b16 %v337
  %v1434 = vunpack.c.l.b16 %v338
  %v1435 = vunpack.c.h.b16 %v338
  %v1436 = vunpack.c.l.b16 %v339
  %v1437 = vunpack.c.h.b16 %v339
  %v1438 = vunpack.c.l.b16 %v340
  %v1439 = vunpack.c.h.b16 %v340
  %v1440 = vunpack.c.l.b16 %v341
  %v1441 = vunpack.c.h.b16 %v341
  %v1442 = vunpack.c.l.b16 %v342
  %v1443 = vunpack.c.h.b16 %v342
  %v1444 = vunpack.c.l.b16 %v343
  %v1445 = vunpack.c.h.b16 %v343
  %v1446 = vunpack.c.l.b16 %v344
  %v1447 = vunpack.c.h.b16 %v344
  %v1448 = vunpack.c.l.b16 %v345
  %v1449 = vunpack.c.h.b16 %v345
  %v1450 = vunpack.c.l.b16 %v346
  %v1451 = vunpack.c.h.b16 %v346
  %v1452 = vunpack.c.l.b16 %v347
  %v1453 = vunpack.c.h.b16 %v347
  %v1454 = vunpack.c.l.b16 %v348
  %v1455 = vunpack.c.h.b16 %v348
  %v1456 = vunpack.c.l.b16 %v349
  %v1457 = vunpack.c.h.b16 %v349
  %v1458 = vunpack.c.l.b16 %v350
  %v1459 = vunpack.c.h.b16 %v350
  %v1460 = vunpack.c.l.b16 %v351
  %v1461 = vunpack.c.h.b16 %v351
  %v1462 = vunpack.c.l.b16 %v352
  %v1463 = vunpack.c.h.b16 %v352
  %v1464 = vunpack.c.l.b16 %v353
  %v1465 = vunpack.c.h.b16 %v353
  %v1466 = vunpack.c.l.b16 %v354
  %v1467 = vunpack.c.h.b16 %v354
  %v1468 = vunpack.c.l.b16 %v355
  %v1469 = vunpack.c.h.b16 %v355
  %v1470 = vunpack.c.l.b16 %v356
  %v1471 = vunpack.c.h.b16 %v356
  %v1472 = vunpack.c.l.b16 %v357
  %v1473 = vunpack.c.h.b16 %v357
  %v1474 = vunpack.c.l.b16 %v358
  %v1475 = vunpack.c.h.b16 %v358
  %v1476 = vunpack.c.l.b16 %v359
  %v1477 = vunpack.c.h.b16 %v359
  %v1478 = vunpack.c.l.b16 %v360
  %v1479 = vunpack.c.h.b16 %v360
  %v1480 = vunpack.c.l.b16 %v361
  %v1481 = vunpack.c.h.b16 %v361
  %v1482 = vunpack.c.l.b16 %v362
  %v1483 = vunpack.c.h.b16 %v362
  %v1484 = vunpack.c.l.b16 %v363
  %v1485 = vunpack.c.h.b16 %v363
  %v1486 = vunpack.c.l.b16 %v364
  %v1487 = vunpack.c.h.b16 %v364
  %v1488 = vunpack.c.l.b16 %v365
  %v1489 = vunpack.c.h.b16 %v365
  %v1490 = vunpack.c.l.b16 %v366
  %v1491 = vunpack.c.h.b16 %v366
  %v1492 = vunpack.c.l.b16 %v367
  %v1493 = vunpack.c.h.b16 %v367
  %v1494 = vunpack.c.l.b16 %v368
  %v1495 = vunpack.c.h.b16 %v368
  %v1496 = vunpack.c.l.b16 %v369
  %v1497 = vunpack.c.h.b16 %v369
  %v1498 = vunpack.c.l.b16 %v370
  %v1499 = vunpack.c.h.b16 %v370
  %v1500 = vunpack.c.l.b16 %v371
  %v1501 = vunpack.c.h.b16 %v371
  %v1502 = vunpack.c.l.b16 %v372
  %v1503 = vunpack.c.h.b16 %v372
  %v1504 = vunpack.c.l.b16 %v373
  %v1505 = vunpack.c.h.b16 %v373
  %v1506 = vunpack.c.l.b16 %v374
  %v1507 = vunpack.c.h.b16 %v374
  %v1508 = vunpack.c.l.b16 %v375
  %v1509 = vunpack.c.h.b16 %v375
  %v1510 = vunpack.c.l.b16 %v376
  %v1511 = vunpack.c.h.b16 %v376
  %v1512 = vunpack.c.l.b16 %v377
  %v1513 = vunpack.c.h.b16 %v377
  %v1514 = vunpack.c.l.b16 %v378
  %v1515 = vunpack.c.h.b16 %v378
  %v1516 = vunpack.c.l.b16 %v379
  %v1517 = vunpack.c.h.b16 %v379
  %v1518 = vunpack.c.l.b16 %v380
  %v1519 = vunpack.c.h.b16 %v380
  %v1520 = vunpack.c.l.b16 %v381
  %v1521 = vunpack.c.h.b16 %v381
  %v1522 = vunpack.c.l.b16 %v382
  %v1523 = vunpack.c.h.b16 %v382
  %v1524 = vunpack.c.l.b16 %v383
  %v1525 = vunpack.c.h.b16 %v383
  %v1526 = vunpack.c.l.b16 %v384
  %v1527 = vunpack.c.h.b16 %v384
  %v1528 = vunpack.c.l.b16 %v385
  %v1529 = vunpack.c.h.b16 %v385
  %v1530 = vunpack.c.l.b16 %v386
  %v1531 = vunpack.c.h.b16 %v386
  %v1532 = vunpack.c.l.b16 %v387
  %v1533 = vunpack.c.h.b16 %v387
  %v1534 = vunpack.c.l.b16 %v388
  %v1535 = vunpack.c.h.b16 %v388
  %v1536 = vunpack.c.l.b16 %v389
  %v1537 = vunpack.c.h.b16 %v389
  %v1538 = vunpack.c.l.b16 %v390
  %v1539 = vunpack.c.h.b16 %v390
  %v1540 = vunpack.c.l.b16 %v391
  %v1541 = vunpack.c.h.b16 %v391
  %v1542 = vunpack.c.l.b16 %v392
  %v1543 = vunpack.c.h.b16 %v392
  %v1544 = vunpack.c.l.b16 %v393
  %v1545 = vunpack.c.h.b16 %v393
  %v1546 = vunpack.c.l.b16 %v394
  %v1547 = vunpack.c.h.b16 %v394
  %v1548 = vunpack.c.l.b16 %v395
  %v1549 = vunpack.c.h.b16 %v395
  %v1550 = vunpack.c.l.b16 %v396
  %v1551 = vunpack.c.h.b16 %v396
  %v1552 = vunpack.c.l.b16 %v397
  %v1553 = vunpack.c.h.b16 %v397
  %v1554 = vunpack.c.l.b16 %v398
  %v1555 = vunpack.c.h.b16 %v398
  %v1556 = vunpack.c.l.b16 %v399
  %v1557 = vunpack.c.h.b16 %v399
  %v1558 = vunpack.c.l.b16 %v400
  %v1559 = vunpack.c.h.b16 %v400
  %v1560 = vunpack.c.l.b16 %v401
  %v1561 = vunpack.c.h.b16 %v401
  %v1562 = vunpack.c.l.b16 %v402
  %v1563 = vunpack.c.h.b16 %v402
  %v1564 = vunpack.c.l.b16 %v403
  %v1565 = vunpack.c.h.b16 %v403
  %v1566 = vunpack.c.l.b16 %v404
  %v1567 = vunpack.c.h.b16 %v404
  %v1568 = vunpack.c.l.b16 %v405
  %v1569 = vunpack.c.h.b16 %v405
  %v1570 = vunpack.c.l.b16 %v406
  %v1571 = vunpack.c.h.b16 %v406
  %v1572 = vunpack.c.l.b16 %v407
  %v1573 = vunpack.c.h.b16 %v407
  %v1574 = vunpack.c.l.b16 %v408
  %v1575 = vunpack.c.h.b16 %v408
  %v1576 = vunpack.c.l.b16 %v409
  %v1577 = vunpack.c.h.b16 %v409
  %v1578 = vunpack.c.l.b16 %v410
  %v1579 = vunpack.c.h.b16 %v410
  %v1580 = vunpack.c.l.b16 %v411
  %v1581 = vunpack.c.h.b16 %v411
  %v1582 = vunpack.c.l.b16 %v412
  %v1583 = vunpack.c.h.b16 %v412
  %v1584 = vunpack.c.l.b16 %v413
  %v1585 = vunpack.c.h.b16 %v413
  %v1586 = vunpack.c.l.b16 %v414
  %v1587 = vunpack.c.h.b16 %v414
  %v1588 = vunpack.c.l.b16 %v415
  %v1589 = vunpack.c.h.b16 %v415
  %v1590 = vunpack.c.l.b16 %v416
  %v1591 = vunpack.c.h.b16 %v416
  %v1592 = vunpack.c.l.b16 %v417
  %v1593 = vunpack.c.h.b16 %v417
  %v1594 = vpack.c.b16 %v818, %v810
  %v1595 = vpack.c.b16 %v819, %v811
  %v1596 = vpack.c.b16 %v820, %v812
  %v1597 = vpack.c.b16 %v821, %v813
  %v1598 = vpack.c.b16 %v822, %v814
  %v1599 = vpack.c.b16 %v823, %v815
  %v1600 = vpack.c.b16 %v824, %v816
  %v1601 = vpack.c.b16 %v825, %v817
  %v1602 = vpack.c.b16 %v834, %v826
  %v1603 = vpack.c.b16 %v835, %v827
  %v1604 = vpack.c.b16 %v836, %v828
  %v1605 = vpack.c.b16 %v837, %v829
  %v1606 = vpack.c.b16 %v838, %v830
  %v1607 = vpack.c.b16 %v839, %v831
  %v1608 = vpack.c.b16 %v840, %v832
  %v1609 = vpack.c.b16 %v841, %v833
  %v1610 = vpack.c.b16 %v850, %v842
  %v1611 = vpack.c.b16 %v851, %v843
  %v1612 = vpack.c.b16 %v852, %v844
  %v1613 = vpack.c.b16 %v853, %v845
  %v1614 = vpack.c.b16 %v854, %v846
  %v1615 = vpack.c.b16 %v855, %v847
  %v1616 = vpack.c.b16 %v856, %v848
  %v1617 = vpack.c.b16 %v857, %v849
  %v1618 = vpack.c.b16 %v866, %v858
  %v1619 = vpack.c.b16 %v867, %v859
  %v1620 = vpack.c.b16 %v868, %v860
  %v1621 = vpack.c.b16 %v869, %v861
  %v1622 = vpack.c.b16 %v870, %v862
  %v1623 = vpack.c.b16 %v871, %v863
  %v1624 = vpack.c.b16 %v872, %v864
  %v1625 = vpack.c.b16 %v873, %v865
  %v1626 = vpack.c.b16 %v882, %v874
  %v1627 = vpack.c.b16 %v883, %v875
  %v1628 = vpack.c.b16 %v884, %v876
  %v1629 = vpack.c.b16 %v885, %v877
  %v1630 = vpack.c.b16 %v886, %v878
  %v1631 = vpack.c.b16 %v887, %v879
  %v1632 = vpack.c.b16 %v888, %v880
  %v1633 = vpack.c.b16 %v889, %v881
  %v1634 = vpack.c.b16 %v898, %v890
  %v1635 = vpack.c.b16 %v899, %v891
  %v1636 = vpack.c.b16 %v900, %v892
  %v1637 = vpack.c.b16 %v901, %v893
  %v1638 = vpack.c.b16 %v902, %v894
  %v1639 = vpack.c.b16 %v903, %v895
  %v1640 = vpack.c.b16 %v904, %v896
  %v1641 = vpack.c.b16 %v905, %v897
  %v1642 = vpack.c.b16 %v914, %v906
  %v1643 = vpack.c.b16 %v915, %v907
  %v1644 = vpack.c.b16 %v916, %v908
  %v1645 = vpack.c.b16 %v917, %v909
  %v1646 = vpack.c.b16 %v918, %v910
  %v1647 = vpack.c.b16 %v919, %v911
  %v1648 = vpack.c.b16 %v920, %v912
  %v1649 = vpack.c.b16 %v921, %v913
  %v1650 = vpack.c.b16 %v930, %v922
  %v1651 = vpack.c.b16 %v931, %v923
  %v1652 = vpack.c.b16 %v932, %v924
  %v1653 = vpack.c.b16 %v933, %v925
  %v1654 = vpack.c.b16 %v934, %v926
  %v1655 = vpack.c.b16 %v935, %v927
  %v1656 = vpack.c.b16 %v936, %v928
  %v1657 = vpack.c.b16 %v937, %v929
  %v1658 = vpack.c.b16 %v946, %v938
  %v1659 = vpack.c.b16 %v947, %v939
  %v1660 = vpack.c.b16 %v948, %v940
  %v1661 = vpack.c.b16 %v949, %v941
  %v1662 = vpack.c.b16 %v950, %v942
  %v1663 = vpack.c.b16 %v951, %v943
  %v1664 = vpack.c.b16 %v952, %v944
  %v1665 = vpack.c.b16 %v953, %v945
  %v1666 = vpack.c.b16 %v962, %v954
  %v1667 = vpack.c.b16 %v963, %v955
  %v1668 = vpack.c.b16 %v964, %v956
  %v1669 = vpack.c.b16 %v965, %v957
  %v1670 = vpack.c.b16 %v966, %v958
  %v1671 = vpack.c.b16 %v967, %v959
  %v1672 = vpack.c.b16 %v968, %v960
  %v1673 = vpack.c.b16 %v969, %v961
  %v1674 = vpack.c.b16 %v978, %v970
  %v1675 = vpack.c.b16 %v979, %v971
  %v1676 = vpack.c.b16 %v980, %v972
  %v1677 = vpack.c.b16 %v981, %v973
  %v1678 = vpack.c.b16 %v982, %v974
  %v1679 = vpack.c.b16 %v983, %v975
  %v1680 = vpack.c.b16 %v984, %v976
  %v1681 = vpack.c.b16 %v985, %v977
  %v1682 = vpack.c.b16 %v994, %v986
  %v1683 = vpack.c.b16 %v995, %v987
  %v1684 = vpack.c.b16 %v996, %v988
  %v1685 = vpack.c.b16 %v997, %v989
  %v1686 = vpack.c.b16 %v998, %v990
  %v1687 = vpack.c.b16 %v999, %v991
  %v1688 = vpack.c.b16 %v1000, %v992
  %v1689 = vpack.c.b16 %v1001, %v993
  %v1690 = vpack.c.b16 %v1010, %v1002
  %v1691 = vpack.c.b16 %v1011, %v1003
  %v1692 = vpack.c.b16 %v1012, %v1004
  %v1693 = vpack.c.b16 %v1013, %v1005
  %v1694 = vpack.c.b16 %v1014, %v1006
  %v1695 = vpack.c.b16 %v1015, %v1007
  %v1696 = vpack.c.b16 %v1016, %v1008
  %v1697 = vpack.c.b16 %v1017, %v1009
  %v1698 = vpack.c.b16 %v1026, %v1018
  %v1699 = vpack.c.b16 %v1027, %v1019
  %v1700 = vpack.c.b16 %v1028, %v1020
  %v1701 = vpack.c.b16 %v1029, %v1021
  %v1702 = vpack.c.b16 %v1030, %v1022
  %v1703 = vpack.c.b16 %v1031, %v1023
  %v1704 = vpack.c.b16 %v1032, %v1024
  %v1705 = vpack.c.b16 %v1033, %v1025
  %v1706 = vpack.c.b16 %v1042, %v1034
  %v1707 = vpack.c.b16 %v1043, %v1035
  %v1708 = vpack.c.b16 %v1044, %v1036
  %v1709 = vpack.c.b16 %v1045, %v1037
  %v1710 = vpack.c.b16 %v1046, %v1038
  %v1711 = vpack.c.b16 %v1047, %v1039
  %v1712 = vpack.c.b16 %v1048, %v1040
  %v1713 = vpack.c.b16 %v1049, %v1041
  %v1714 = vpack.c.b16 %v1058, %v1050
  %v1715 = vpack.c.b16 %v1059, %v1051
  %v1716 = vpack.c.b16 %v1060, %v1052
  %v1717 = vpack.c.b16 %v1061, %v1053
  %v1718 = vpack.c.b16 %v1062, %v1054
  %v1719 = vpack.c.b16 %v1063, %v1055
  %v1720 = vpack.c.b16 %v1064, %v1056
  %v1721 = vpack.c.b16 %v1065, %v1057
  %v1722 = vpack.c.b16 %v1074, %v1066
  %v1723 = vpack.c.b16 %v1075, %v1067
  %v1724 = vpack.c.b16 %v1076, %v1068
  %v1725 = vpack.c.b16 %v1077, %v1069
  %v1726 = vpack.c.b16 %v1078, %v1070
  %v1727 = vpack.c.b16 %v1079, %v1071
  %v1728 = vpack.c.b16 %v1080, %v1072
  %v1729 = vpack.c.b16 %v1081, %v1073
  %v1730 = vpack.c.b16 %v1090, %v1082
  %v1731 = vpack.c.b16 %v1091, %v1083
  %v1732 = vpack.c.b16 %v1092, %v1084
  %v1733 = vpack.c.b16 %v1093, %v1085
  %v1734 = vpack.c.b16 %v1094, %v1086
  %v1735 = vpack.c.b16 %v1095, %v1087
  %v1736 = vpack.c.b16 %v1096, %v1088
  %v1737 = vpack.c.b16 %v1097, %v1089
  %v1738 = vpack.c.b16 %v1106, %v1098
  %v1739 = vpack.c.b16 %v1107, %v1099
  %v1740 = vpack.c.b16 %v1108, %v1100
  %v1741 = vpack.c.b16 %v1109, %v1101
  %v1742 = vpack.c.b16 %v1110, %v1102
  %v1743 = vpack.c.b16 %v1111, %v1103
  %v1744 = vpack.c.b16 %v1112, %v1104
  %v1745 = vpack.c.b16 %v1113, %v1105
  %v1746 = vpack.c.b16 %v1122, %v1114
  %v1747 = vpack.c.b16 %v1123, %v1115
  %v1748 = vpack.c.b16 %v1124, %v1116
  %v1749 = vpack.c.b16 %v1125, %v1117
  %v1750 = vpack.c.b16 %v1126, %v1118
  %v1751 = vpack.c.b16 %v1127, %v1119
  %v1752 = vpack.c.b16 %v1128, %v1120
  %v1753 = vpack.c.b16 %v1129, %v1121
  %v1754 = vpack.c.b16 %v1138, %v1130
  %v1755 = vpack.c.b16 %v1139, %v1131
  %v1756 = vpack.c.b16 %v1140, %v1132
  %v1757 = vpack.c.b16 %v1141, %v1133
  %v1758 = vpack.c.b16 %v1142, %v1134
  %v1759 = vpack.c.b16 %v1143, %v1135
  %v1760 = vpack.c.b16 %v1144, %v1136
  %v1761 = vpack.c.b16 %v1145, %v1137
  %v1762 = vpack.c.b16 %v1154, %v1146
  %v1763 = vpack.c.b16 %v1155, %v1147
  %v1764 = vpack.c.b16 %v1156, %v1148
  %v1765 = vpack.c.b16 %v1157, %v1149
  %v1766 = vpack.c.b16 %v1158, %v1150
  %v1767 = vpack.c.b16 %v1159, %v1151
  %v1768 = vpack.c.b16 %v1160, %v1152
  %v1769 = vpack.c.b16 %v1161, %v1153
  %v1770 = vpack.c.b16 %v1170, %v1162
  %v1771 = vpack.c.b16 %v1171, %v1163
  %v1772 = vpack.c.b16 %v1172, %v1164
  %v1773 = vpack.c.b16 %v1173, %v1165
  %v1774 = vpack.c.b16 %v1174, %v1166
  %v1775 = vpack.c.b16 %v1175, %v1167
  %v1776 = vpack.c.b16 %v1176, %v1168
  %v1777 = vpack.c.b16 %v1177, %v1169
  %v1778 = vpack.c.b16 %v1186, %v1178
  %v1779 = vpack.c.b16 %v1187, %v1179
  %v1780 = vpack.c.b16 %v1188, %v1180
  %v1781 = vpack.c.b16 %v1189, %v1181
  %v1782 = vpack.c.b16 %v1190, %v1182
  %v1783 = vpack.c.b16 %v1191, %v1183
  %v1784 = vpack.c.b16 %v1192, %v1184
  %v1785 = vpack.c.b16 %v1193, %v1185
  %v1786 = vpack.c.b16 %v1202, %v1194
  %v1787 = vpack.c.b16 %v1203, %v1195
  %v1788 = vpack.c.b16 %v1204, %v1196
  %v1789 = vpack.c.b16 %v1205, %v1197
  %v1790 = vpack.c.b16 %v1206, %v1198
  %v1791 = vpack.c.b16 %v1207, %v1199
  %v1792 = vpack.c.b16 %v1208, %v1200
  %v1793 = vpack.c.b16 %v1209, %v1201
  %v1794 = vpack.c.b16 %v1218, %v1210
  %v1795 = vpack.c.b16 %v1219, %v1211
  %v1796 = vpack.c.b16 %v1220, %v1212
  %v1797 = vpack.c.b16 %v1221, %v1213
  %v1798 = vpack.c.b16 %v1222, %v1214
  %v1799 = vpack.c.b16 %v1223, %v1215
  %v1800 = vpack.c.b16 %v1224, %v1216
  %v1801 = vpack.c.b16 %v1225, %v1217
  %v1802 = vpack.c.b16 %v1234, %v1226
  %v1803 = vpack.c.b16 %v1235, %v1227
  %v1804 = vpack.c.b16 %v1236, %v1228
  %v1805 = vpack.c.b16 %v1237, %v1229
  %v1806 = vpack.c.b16 %v1238, %v1230
  %v1807 = vpack.c.b16 %v1239, %v1231
  %v1808 = vpack.c.b16 %v1240, %v1232
  %v1809 = vpack.c.b16 %v1241, %v1233
  %v1810 = vpack.c.b16 %v1250, %v1242
  %v1811 = vpack.c.b16 %v1251, %v1243
  %v1812 = vpack.c.b16 %v1252, %v1244
  %v1813 = vpack.c.b16 %v1253, %v1245
  %v1814 = vpack.c.b16 %v1254, %v1246
  %v1815 = vpack.c.b16 %v1255, %v1247
  %v1816 = vpack.c.b16 %v1256, %v1248
  %v1817 = vpack.c.b16 %v1257, %v1249
  %v1818 = vpack.c.b16 %v1266, %v1258
  %v1819 = vpack.c.b16 %v1267, %v1259
  %v1820 = vpack.c.b16 %v1268, %v1260
  %v1821 = vpack.c.b16 %v1269, %v1261
  %v1822 = vpack.c.b16 %v1270, %v1262
  %v1823 = vpack.c.b16 %v1271, %v1263
  %v1824 = vpack.c.b16 %v1272, %v1264
  %v1825 = vpack.c.b16 %v1273, %v1265
  %v1826 = vpack.c.b16 %v1282, %v1274
  %v1827 = vpack.c.b16 %v1283, %v1275
  %v1828 = vpack.c.b16 %v1284, %v1276
  %v1829 = vpack.c.b16 %v1285, %v1277
  %v1830 = vpack.c.b16 %v1286, %v1278
  %v1831 = vpack.c.b16 %v1287, %v1279
  %v1832 = vpack.c.b16 %v1288, %v1280
  %v1833 = vpack.c.b16 %v1289, %v1281
  %v1834 = vpack.c.b16 %v1298, %v1290
  %v1835 = vpack.c.b16 %v1299, %v1291
  %v1836 = vpack.c.b16 %v1300, %v1292
  %v1837 = vpack.c.b16 %v1301, %v1293
  %v1838 = vpack.c.b16 %v1302, %v1294
  %v1839 = vpack.c.b16 %v1303, %v1295
  %v1840 = vpack.c.b16 %v1304, %v1296
  %v1841 = vpack.c.b16 %v1305, %v1297
  %v1842 = vpack.c.b16 %v1314, %v1306
  %v1843 = vpack.c.b16 %v1315, %v1307
  %v1844 = vpack.c.b16 %v1316, %v1308
  %v1845 = vpack.c.b16 %v1317, %v1309
  %v1846 = vpack.c.b16 %v1318, %v1310
  %v1847 = vpack.c.b16 %v1319, %v1311
  %v1848 = vpack.c.b16 %v1320, %v1312
  %v1849 = vpack.c.b16 %v1321, %v1313
  %v1850 = vpack.c.b16 %v1330, %v1322
  %v1851 = vpack.c.b16 %v1331, %v1323
  %v1852 = vpack.c.b16 %v1332, %v1324
  %v1853 = vpack.c.b16 %v1333, %v1325
  %v1854 = vpack.c.b16 %v1334, %v1326
  %v1855 = vpack.c.b16 %v1335, %v1327
  %v1856 = vpack.c.b16 %v1336, %v1328
  %v1857 = vpack.c.b16 %v1337, %v1329
  %v1858 = vpack.c.b16 %v1346, %v1338
  %v1859 = vpack.c.b16 %v1347, %v1339
  %v1860 = vpack.c.b16 %v1348, %v1340
  %v1861 = vpack.c.b16 %v1349, %v1341
  %v1862 = vpack.c.b16 %v1350, %v1342
  %v1863 = vpack.c.b16 %v1351, %v1343
  %v1864 = vpack.c.b16 %v1352, %v1344
  %v1865 = vpack.c.b16 %v1353, %v1345
  %v1866 = vpack.c.b16 %v1362, %v1354
  %v1867 = vpack.c.b16 %v1363, %v1355
  %v1868 = vpack.c.b16 %v1364, %v1356
  %v1869 = vpack.c.b16 %v1365, %v1357
  %v1870 = vpack.c.b16 %v1366, %v1358
  %v1871 = vpack.c.b16 %v1367, %v1359
  %v1872 = vpack.c.b16 %v1368, %v1360
  %v1873 = vpack.c.b16 %v1369, %v1361
  %v1874 = vpack.c.b16 %v1378, %v1370
  %v1875 = vpack.c.b16 %v1379, %v1371
  %v1876 = vpack.c.b16 %v1380, %v1372
  %v1877 = vpack.c.b16 %v1381, %v1373
  %v1878 = vpack.c.b16 %v1382, %v1374
  %v1879 = vpack.c.b16 %v1383, %v1375
  %v1880 = vpack.c.b16 %v1384, %v1376
  %v1881 = vpack.c.b16 %v1385, %v1377
  %v1882 = vpack.c.b16 %v1394, %v1386
  %v1883 = vpack.c.b16 %v1395, %v1387
  %v1884 = vpack.c.b16 %v1396, %v1388
  %v1885 = vpack.c.b16 %v1397, %v1389
  %v1886 = vpack.c.b16 %v1398, %v1390
  %v1887 = vpack.c.b16 %v1399, %v1391
  %v1888 = vpack.c.b16 %v1400, %v1392
  %v1889 = vpack.c.b16 %v1401, %v1393
  %v1890 = vpack.c.b16 %v1410, %v1402
  %v1891 = vpack.c.b16 %v1411, %v1403
  %v1892 = vpack.c.b16 %v1412, %v1404
  %v1893 = vpack.c.b16 %v1413, %v1405
  %v1894 = vpack.c.b16 %v1414, %v1406
  %v1895 = vpack.c.b16 %v1415, %v1407
  %v1896 = vpack.c.b16 %v1416, %v1408
  %v1897 = vpack.c.b16 %v1417, %v1409
  %v1898 = vpack.c.b16 %v1426, %v1418
  %v1899 = vpack.c.b16 %v1427, %v1419
  %v1900 = vpack.c.b16 %v1428, %v1420
  %v1901 = vpack.c.b16 %v1429, %v1421
  %v1902 = vpack.c.b16 %v1430, %v1422
  %v1903 = vpack.c.b16 %v1431, %v1423
  %v1904 = vpack.c.b16 %v1432, %v1424
  %v1905 = vpack.c.b16 %v1433, %v1425
  %v1906 = vpack.c.b16 %v1442, %v1434
  %v1907 = vpack.c.b16 %v1443, %v1435
  %v1908 = vpack.c.b16 %v1444, %v1436
  %v1909 = vpack.c.b16 %v1445, %v1437
  %v1910 = vpack.c.b16 %v1446, %v1438
  %v1911 = vpack.c.b16 %v1447, %v1439
  %v1912 = vpack.c.b16 %v1448, %v1440
  %v1913 = vpack.c.b16 %v1449, %v1441
  %v1914 = vpack.c.b16 %v1458, %v1450
  %v1915 = vpack.c.b16 %v1459, %v1451
  %v1916 = vpack.c.b16 %v1460, %v1452
  %v1917 = vpack.c.b16 %v1461, %v1453
  %v1918 = vpack.c.b16 %v1462, %v1454
  %v1919 = vpack.c.b16 %v1463, %v1455
  %v1920 = vpack.c.b16 %v1464, %v1456
  %v1921 = vpack.c.b16 %v1465, %v1457
  %v1922 = vpack.c.b16 %v1474, %v1466
  %v1923 = vpack.c.b16 %v1475, %v1467
  %v1924 = vpack.c.b16 %v1476, %v1468
  %v1925 = vpack.c.b16 %v1477, %v1469
  %v1926 = vpack.c.b16 %v1478, %v1470
  %v1927 = vpack.c.b16 %v1479, %v1471
  %v1928 = vpack.c.b16 %v1480, %v1472
  %v1929 = vpack.c.b16 %v1481, %v1473
  %v1930 = vpack.c.b16 %v1490, %v1482
  %v1931 = vpack.c.b16 %v1491, %v1483
  %v1932 = vpack.c.b16 %v1492, %v1484
  %v1933 = vpack.c.b16 %v1493, %v1485
  %v1934 = vpack.c.b16 %v1494, %v1486
  %v1935 = vpack.c.b16 %v1495, %v1487
  %v1936 = vpack.c.b16 %v1496, %v1488
  %v1937 = vpack.c.b16 %v1497, %v1489
  %v1938 = vpack.c.b16 %v1506, %v1498
  %v1939 = vpack.c.b16 %v1507, %v1499
  %v1940 = vpack.c.b16 %v1508, %v1500
  %v1941 = vpack.c.b16 %v1509, %v1501
  %v1942 = vpack.c.b16 %v1510, %v1502
  %v1943 = vpack.c.b16 %v1511, %v1503
  %v1944 = vpack.c.b16 %v1512, %v1504
  %v1945 = vpack.c.b16 %v1513, %v1505
  %v1946 = vpack.c.b16 %v1522, %v1514
  %v1947 = vpack.c.b16 %v1523, %v1515
  %v1948 = vpack.c.b16 %v1524, %v1516
  %v1949 = vpack.c.b16 %v1525, %v1517
  %v1950 = vpack.c.b16 %v1526, %v1518
  %v1951 = vpack.c.b16 %v1527, %v1519
  %v1952 = vpack.c.b16 %v1528, %v1520
  %v1953 = vpack.c.b16 %v1529, %v1521
  %v1954 = vpack.c.b16 %v1538, %v1530
  %v1955 = vpack.c.b16 %v1539, %v1531
  %v1956 = vpack.c.b16 %v1540, %v1532
  %v1957 = vpack.c.b16 %v1541, %v1533
  %v1958 = vpack.c.b16 %v1542, %v1534
  %v1959 = vpack.c.b16 %v1543, %v1535
  %v1960 = vpack.c.b16 %v1544, %v1536
  %v1961 = vpack.c.b16 %v1545, %v1537
  %v1962 = vpack.c.b16 %v1554, %v1546
  %v1963 = vpack.c.b16 %v1555, %v1547
  %v1964 = vpack.c.b16 %v1556, %v1548
  %v1965 = vpack.c.b16 %v1557, %v1549
  %v1966 = vpack.c.b16 %v1558, %v1550
  %v1967 = vpack.c.b16 %v1559, %v1551
  %v1968 = vpack.c.b16 %v1560, %v1552
  %v1969 = vpack.c.b16 %v1561, %v1553
  %v1970 = vpack.c.b16 %v1570, %v1562
  %v1971 = vpack.c.b16 %v1571, %v1563
  %v1972 = vpack.c.b16 %v1572, %v1564
  %v1973 = vpack.c.b16 %v1573, %v1565
  %v1974 = vpack.c.b16 %v1574, %v1566
  %v1975 = vpack.c.b16 %v1575, %v1567
  %v1976 = vpack.c.b16 %v1576, %v1568
  %v1977 = vpack.c.b16 %v1577, %v1569
  %v1978 = vpack.c.b16 %v1586, %v1578
  %v1979 = vpack.c.b16 %v1587, %v1579
  %v1980 = vpack.c.b16 %v1588, %v1580
  %v1981 = vpack.c.b16 %v1589, %v1581
  %v1982 = vpack.c.b16 %v1590, %v1582
  %v1983 = vpack.c.b16 %v1591, %v1583
  %v1984 = vpack.c.b16 %v1592, %v1584
  %v1985 = vpack.c.b16 %v1593, %v1585
  %vm2378 = vcmask 130048
  %v2380 = vsel %vm2378, %v25, 0
  %2382 = vmatprep.subr.bf16.mxu0 %v1595
  %2383 = vmatpush1.bf16.msra.mxu0 %v1594
  %2384 = vmatprep.subr.bf16.mxu0 %v1603
  %2385 = vmatpush1.bf16.msra.mxu0 %v1602
  %2386 = vmatprep.subr.bf16.mxu0 %v1611
  %2387 = vmatpush1.bf16.msra.mxu0 %v1610
  %2388 = vmatprep.subr.bf16.mxu0 %v1619
  %2389 = vmatpush1.bf16.msra.mxu0 %v1618
  %2390 = vmatprep.subr.bf16.mxu0 %v1627
  %2391 = vmatpush1.bf16.msra.mxu0 %v1626
  %2392 = vmatprep.subr.bf16.mxu0 %v1635
  %2393 = vmatpush1.bf16.msra.mxu0 %v1634
  %2394 = vmatprep.subr.bf16.mxu0 %v1643
  %2395 = vmatpush1.bf16.msra.mxu0 %v1642
  %2396 = vmatprep.subr.bf16.mxu0 %v1651
  %2397 = vmatpush1.bf16.msra.mxu0 %v1650
  %2398 = vmatprep.subr.bf16.mxu0 %v1659
  %2399 = vmatpush1.bf16.msra.mxu0 %v1658
  %2400 = vmatprep.subr.bf16.mxu0 %v1667
  %2401 = vmatpush1.bf16.msra.mxu0 %v1666
  %2402 = vmatprep.subr.bf16.mxu0 %v1675
  %2403 = vmatpush1.bf16.msra.mxu0 %v1674
  %2404 = vmatprep.subr.bf16.mxu0 %v1683
  %2405 = vmatpush1.bf16.msra.mxu0 %v1682
  %2406 = vmatprep.subr.bf16.mxu0 %v1691
  %2407 = vmatpush1.bf16.msra.mxu0 %v1690
  %2408 = vmatprep.subr.bf16.mxu0 %v1699
  %2409 = vmatpush1.bf16.msra.mxu0 %v1698
  %2410 = vmatprep.subr.bf16.mxu0 %v1707
  %2411 = vmatpush1.bf16.msra.mxu0 %v1706
  %2412 = vmatprep.subr.bf16.mxu0 %v1715
  %2413 = vmatpush1.bf16.msra.mxu0 %v1714
  %2414 = vmatprep.mubr.bf16.mxu0 %v20
  %2415 = vmatmul.mubr.bf16.gmra.mrb[0].mxu0 %v19
  %v2416 = vpop.f32.mrb[0].mxu0
  %v2417 = vadd.f32 -1.0, %v2416
  %v2418 = vpop.f32.mrb[0].mxu0
  %v2419 = vadd.f32 -1.0, %v2418
  %v2420 = vpop.f32.mrb[0].mxu0
  %v2421 = vpop.f32.mrb[0].mxu0
  %2422 = vdwg.mxu0
  %2423 = vmatprep.subr.bf16.mxu0 %v1723
  %2424 = vmatpush1.bf16.msra.mxu0 %v1722
  %2425 = vmatprep.subr.bf16.mxu0 %v1731
  %2426 = vmatpush1.bf16.msra.mxu0 %v1730
  %2427 = vmatprep.subr.bf16.mxu0 %v1739
  %2428 = vmatpush1.bf16.msra.mxu0 %v1738
  %2429 = vmatprep.subr.bf16.mxu0 %v1747
  %2430 = vmatpush1.bf16.msra.mxu0 %v1746
  %2431 = vmatprep.subr.bf16.mxu0 %v1755
  %2432 = vmatpush1.bf16.msra.mxu0 %v1754
  %2433 = vmatprep.subr.bf16.mxu0 %v1763
  %2434 = vmatpush1.bf16.msra.mxu0 %v1762
  %2435 = vmatprep.subr.bf16.mxu0 %v1771
  %2436 = vmatpush1.bf16.msra.mxu0 %v1770
  %2437 = vmatprep.subr.bf16.mxu0 %v1779
  %2438 = vmatpush1.bf16.msra.mxu0 %v1778
  %2439 = vmatprep.subr.bf16.mxu0 %v1787
  %2440 = vmatpush1.bf16.msra.mxu0 %v1786
  %2441 = vmatprep.subr.bf16.mxu0 %v1795
  %2442 = vmatpush1.bf16.msra.mxu0 %v1794
  %2443 = vmatprep.subr.bf16.mxu0 %v1803
  %2444 = vmatpush1.bf16.msra.mxu0 %v1802
  %2445 = vmatprep.subr.bf16.mxu0 %v1811
  %2446 = vmatpush1.bf16.msra.mxu0 %v1810
  %2447 = vmatprep.subr.bf16.mxu0 %v1819
  %2448 = vmatpush1.bf16.msra.mxu0 %v1818
  %2449 = vmatprep.subr.bf16.mxu0 %v1827
  %2450 = vmatpush1.bf16.msra.mxu0 %v1826
  %2451 = vmatprep.subr.bf16.mxu0 %v1835
  %2452 = vmatpush1.bf16.msra.mxu0 %v1834
  %2453 = vmatprep.subr.bf16.mxu0 %v1843
  %2454 = vmatpush1.bf16.msra.mxu0 %v1842
  %2455 = vmatprep.mubr.bf16.mxu0 %v22
  %2456 = vmatmul.mubr.bf16.gmra.mrb[0].mxu0 %v21
  %v2457 = vpop.f32.mrb[0].mxu0
  %v2458 = vadd.f32 %v2417, %v2457
  %v2459 = vpop.f32.mrb[0].mxu0
  %v2460 = vadd.f32 %v2419, %v2459
  %v2461 = vpop.f32.mrb[0].mxu0
  %v2462 = vpop.f32.mrb[0].mxu0
  %2463 = vdwg.mxu0
  %2464 = vmatprep.subr.bf16.mxu0 %v1851
  %2465 = vmatpush1.bf16.msra.mxu0 %v1850
  %2466 = vmatprep.subr.bf16.mxu0 %v1859
  %2467 = vmatpush1.bf16.msra.mxu0 %v1858
  %2468 = vmatprep.subr.bf16.mxu0 %v1867
  %2469 = vmatpush1.bf16.msra.mxu0 %v1866
  %2470 = vmatprep.subr.bf16.mxu0 %v1875
  %2471 = vmatpush1.bf16.msra.mxu0 %v1874
  %2472 = vmatprep.subr.bf16.mxu0 %v1883
  %2473 = vmatpush1.bf16.msra.mxu0 %v1882
  %2474 = vmatprep.subr.bf16.mxu0 %v1891
  %2475 = vmatpush1.bf16.msra.mxu0 %v1890
  %2476 = vmatprep.subr.bf16.mxu0 %v1899
  %2477 = vmatpush1.bf16.msra.mxu0 %v1898
  %2478 = vmatprep.subr.bf16.mxu0 %v1907
  %2479 = vmatpush1.bf16.msra.mxu0 %v1906
  %2480 = vmatprep.subr.bf16.mxu0 %v1915
  %2481 = vmatpush1.bf16.msra.mxu0 %v1914
  %2482 = vmatprep.subr.bf16.mxu0 %v1923
  %2483 = vmatpush1.bf16.msra.mxu0 %v1922
  %2484 = vmatprep.subr.bf16.mxu0 %v1931
  %2485 = vmatpush1.bf16.msra.mxu0 %v1930
  %2486 = vmatprep.subr.bf16.mxu0 %v1939
  %2487 = vmatpush1.bf16.msra.mxu0 %v1938
  %2488 = vmatprep.subr.bf16.mxu0 %v1947
  %2489 = vmatpush1.bf16.msra.mxu0 %v1946
  %2490 = vmatprep.subr.bf16.mxu0 %v1955
  %2491 = vmatpush1.bf16.msra.mxu0 %v1954
  %2492 = vmatprep.subr.bf16.mxu0 %v1963
  %2493 = vmatpush1.bf16.msra.mxu0 %v1962
  %2494 = vmatprep.subr.bf16.mxu0 %v1971
  %2495 = vmatpush1.bf16.msra.mxu0 %v1970
  %2496 = vmatprep.mubr.bf16.mxu0 %v24
  %2497 = vmatmul.mubr.bf16.gmra.mrb[0].mxu0 %v23
  %v2498 = vpop.f32.mrb[0].mxu0
  %v2499 = vadd.f32 %v2458, %v2498
  %v2500 = vpop.f32.mrb[0].mxu0
  %v2501 = vadd.f32 %v2460, %v2500
  %v2502 = vpop.f32.mrb[0].mxu0
  %v2503 = vpop.f32.mrb[0].mxu0
  %2504 = vdwg.mxu0
  %2505 = vmatprep.subr.bf16.mxu0 %v1979
  %2506 = vmatpush1.bf16.msra.mxu0 %v1978
  %2507 = vmatprep.subr.bf16.mxu0 0
  %2508 = vmatpush1.bf16.msra.mxu0 0
  %2509 = vmatprep.subr.bf16.mxu0 0
  %2510 = vmatpush1.bf16.msra.mxu0 0
  %2511 = vmatprep.subr.bf16.mxu0 0
  %2512 = vmatpush1.bf16.msra.mxu0 0
  %2513 = vmatprep.subr.bf16.mxu0 0
  %2514 = vmatpush1.bf16.msra.mxu0 0
  %2515 = vmatprep.subr.bf16.mxu0 0
  %2516 = vmatpush1.bf16.msra.mxu0 0
  %2517 = vmatprep.subr.bf16.mxu0 0
  %2518 = vmatpush1.bf16.msra.mxu0 0
  %2519 = vmatprep.subr.bf16.mxu0 0
  %2520 = vmatpush1.bf16.msra.mxu0 0
  %2521 = vmatprep.subr.bf16.mxu0 0
  %2522 = vmatpush1.bf16.msra.mxu0 0
  %2523 = vmatprep.subr.bf16.mxu0 0
  %2524 = vmatpush1.bf16.msra.mxu0 0
  %2525 = vmatprep.subr.bf16.mxu0 0
  %2526 = vmatpush1.bf16.msra.mxu0 0
  %2527 = vmatprep.subr.bf16.mxu0 0
  %2528 = vmatpush1.bf16.msra.mxu0 0
  %2529 = vmatprep.subr.bf16.mxu0 0
  %2530 = vmatpush1.bf16.msra.mxu0 0
  %2531 = vmatprep.subr.bf16.mxu0 0
  %2532 = vmatpush1.bf16.msra.mxu0 0
  %2533 = vmatprep.subr.bf16.mxu0 0
  %2534 = vmatpush1.bf16.msra.mxu0 0
  %2535 = vmatprep.subr.bf16.mxu0 0
  %2536 = vmatpush1.bf16.msra.mxu0 0
  %2537 = vmatprep.mubr.bf16.mxu0 0
  %2538 = vmatmul.mubr.bf16.gmra.mrb[0].mxu0 %v2380
  %v2539 = vpop.f32.mrb[0].mxu0
  %v2540 = vadd.f32 %v2499, %v2539
  %v2541 = vpop.f32.mrb[0].mxu0
  %v2542 = vadd.f32 %v2501, %v2541
  %v2543 = vpop.f32.mrb[0].mxu0
  %v2544 = vpop.f32.mrb[0].mxu0
  %2545 = vdwg.mxu0
  %2546 = vmatprep.subr.bf16.mxu0 %v1597
  %2547 = vmatpush1.bf16.msra.mxu0 %v1596
  %2548 = vmatprep.subr.bf16.mxu0 %v1605
  %2549 = vmatpush1.bf16.msra.mxu0 %v1604
  %2550 = vmatprep.subr.bf16.mxu0 %v1613
  %2551 = vmatpush1.bf16.msra.mxu0 %v1612
  %2552 = vmatprep.subr.bf16.mxu0 %v1621
  %2553 = vmatpush1.bf16.msra.mxu0 %v1620
  %2554 = vmatprep.subr.bf16.mxu0 %v1629
  %2555 = vmatpush1.bf16.msra.mxu0 %v1628
  %2556 = vmatprep.subr.bf16.mxu0 %v1637
  %2557 = vmatpush1.bf16.msra.mxu0 %v1636
  %2558 = vmatprep.subr.bf16.mxu0 %v1645
  %2559 = vmatpush1.bf16.msra.mxu0 %v1644
  %2560 = vmatprep.subr.bf16.mxu0 %v1653
  %2561 = vmatpush1.bf16.msra.mxu0 %v1652
  %2562 = vmatprep.subr.bf16.mxu0 %v1661
  %2563 = vmatpush1.bf16.msra.mxu0 %v1660
  %2564 = vmatprep.subr.bf16.mxu0 %v1669
  %2565 = vmatpush1.bf16.msra.mxu0 %v1668
  %2566 = vmatprep.subr.bf16.mxu0 %v1677
  %2567 = vmatpush1.bf16.msra.mxu0 %v1676
  %2568 = vmatprep.subr.bf16.mxu0 %v1685
  %2569 = vmatpush1.bf16.msra.mxu0 %v1684
  %2570 = vmatprep.subr.bf16.mxu0 %v1693
  %2571 = vmatpush1.bf16.msra.mxu0 %v1692
  %2572 = vmatprep.subr.bf16.mxu0 %v1701
  %2573 = vmatpush1.bf16.msra.mxu0 %v1700
  %2574 = vmatprep.subr.bf16.mxu0 %v1709
  %2575 = vmatpush1.bf16.msra.mxu0 %v1708
  %2576 = vmatprep.subr.bf16.mxu0 %v1717
  %2577 = vmatpush1.bf16.msra.mxu0 %v1716
  %2578 = vmatprep.mubr.bf16.mxu0 %v20
  %2579 = vmatmul.mubr.bf16.gmra.mrb[0].mxu0 %v19
  %v2580 = vpop.f32.mrb[0].mxu0
  %v2581 = vadd.f32 -1.0, %v2580
  %v2582 = vpop.f32.mrb[0].mxu0
  %v2583 = vadd.f32 -1.0, %v2582
  %v2584 = vpop.f32.mrb[0].mxu0
  %v2585 = vpop.f32.mrb[0].mxu0
  %2586 = vdwg.mxu0
  %2587 = vmatprep.subr.bf16.mxu0 %v1725
  %2588 = vmatpush1.bf16.msra.mxu0 %v1724
  %2589 = vmatprep.subr.bf16.mxu0 %v1733
  %2590 = vmatpush1.bf16.msra.mxu0 %v1732
  %2591 = vmatprep.subr.bf16.mxu0 %v1741
  %2592 = vmatpush1.bf16.msra.mxu0 %v1740
  %2593 = vmatprep.subr.bf16.mxu0 %v1749
  %2594 = vmatpush1.bf16.msra.mxu0 %v1748
  %2595 = vmatprep.subr.bf16.mxu0 %v1757
  %2596 = vmatpush1.bf16.msra.mxu0 %v1756
  %2597 = vmatprep.subr.bf16.mxu0 %v1765
  %2598 = vmatpush1.bf16.msra.mxu0 %v1764
  %2599 = vmatprep.subr.bf16.mxu0 %v1773
  %2600 = vmatpush1.bf16.msra.mxu0 %v1772
  %2601 = vmatprep.subr.bf16.mxu0 %v1781
  %2602 = vmatpush1.bf16.msra.mxu0 %v1780
  %2603 = vmatprep.subr.bf16.mxu0 %v1789
  %2604 = vmatpush1.bf16.msra.mxu0 %v1788
  %2605 = vmatprep.subr.bf16.mxu0 %v1797
  %2606 = vmatpush1.bf16.msra.mxu0 %v1796
  %2607 = vmatprep.subr.bf16.mxu0 %v1805
  %2608 = vmatpush1.bf16.msra.mxu0 %v1804
  %2609 = vmatprep.subr.bf16.mxu0 %v1813
  %2610 = vmatpush1.bf16.msra.mxu0 %v1812
  %2611 = vmatprep.subr.bf16.mxu0 %v1821
  %2612 = vmatpush1.bf16.msra.mxu0 %v1820
  %2613 = vmatprep.subr.bf16.mxu0 %v1829
  %2614 = vmatpush1.bf16.msra.mxu0 %v1828
  %2615 = vmatprep.subr.bf16.mxu0 %v1837
  %2616 = vmatpush1.bf16.msra.mxu0 %v1836
  %2617 = vmatprep.subr.bf16.mxu0 %v1845
  %2618 = vmatpush1.bf16.msra.mxu0 %v1844
  %2619 = vmatprep.mubr.bf16.mxu0 %v22
  %2620 = vmatmul.mubr.bf16.gmra.mrb[0].mxu0 %v21
  %v2621 = vpop.f32.mrb[0].mxu0
  %v2622 = vadd.f32 %v2581, %v2621
  %v2623 = vpop.f32.mrb[0].mxu0
  %v2624 = vadd.f32 %v2583, %v2623
  %v2625 = vpop.f32.mrb[0].mxu0
  %v2626 = vpop.f32.mrb[0].mxu0
  %2627 = vdwg.mxu0
  %2628 = vmatprep.subr.bf16.mxu0 %v1853
  %2629 = vmatpush1.bf16.msra.mxu0 %v1852
  %2630 = vmatprep.subr.bf16.mxu0 %v1861
  %2631 = vmatpush1.bf16.msra.mxu0 %v1860
  %2632 = vmatprep.subr.bf16.mxu0 %v1869
  %2633 = vmatpush1.bf16.msra.mxu0 %v1868
  %2634 = vmatprep.subr.bf16.mxu0 %v1877
  %2635 = vmatpush1.bf16.msra.mxu0 %v1876
  %2636 = vmatprep.subr.bf16.mxu0 %v1885
  %2637 = vmatpush1.bf16.msra.mxu0 %v1884
  %2638 = vmatprep.subr.bf16.mxu0 %v1893
  %2639 = vmatpush1.bf16.msra.mxu0 %v1892
  %2640 = vmatprep.subr.bf16.mxu0 %v1901
  %2641 = vmatpush1.bf16.msra.mxu0 %v1900
  %2642 = vmatprep.subr.bf16.mxu0 %v1909
  %2643 = vmatpush1.bf16.msra.mxu0 %v1908
  %2644 = vmatprep.subr.bf16.mxu0 %v1917
  %2645 = vmatpush1.bf16.msra.mxu0 %v1916
  %2646 = vmatprep.subr.bf16.mxu0 %v1925
  %2647 = vmatpush1.bf16.msra.mxu0 %v1924
  %2648 = vmatprep.subr.bf16.mxu0 %v1933
  %2649 = vmatpush1.bf16.msra.mxu0 %v1932
  %2650 = vmatprep.subr.bf16.mxu0 %v1941
  %2651 = vmatpush1.bf16.msra.mxu0 %v1940
  %2652 = vmatprep.subr.bf16.mxu0 %v1949
  %2653 = vmatpush1.bf16.msra.mxu0 %v1948
  %2654 = vmatprep.subr.bf16.mxu0 %v1957
  %2655 = vmatpush1.bf16.msra.mxu0 %v1956
  %2656 = vmatprep.subr.bf16.mxu0 %v1965
  %2657 = vmatpush1.bf16.msra.mxu0 %v1964
  %2658 = vmatprep.subr.bf16.mxu0 %v1973
  %2659 = vmatpush1.bf16.msra.mxu0 %v1972
  %2660 = vmatprep.mubr.bf16.mxu0 %v24
  %2661 = vmatmul.mubr.bf16.gmra.mrb[0].mxu0 %v23
  %v2662 = vpop.f32.mrb[0].mxu0
  %v2663 = vadd.f32 %v2622, %v2662
  %v2664 = vpop.f32.mrb[0].mxu0
  %v2665 = vadd.f32 %v2624, %v2664
  %v2666 = vpop.f32.mrb[0].mxu0
  %v2667 = vpop.f32.mrb[0].mxu0
  %2668 = vdwg.mxu0
  %2669 = vmatprep.subr.bf16.mxu0 %v1981
  %2670 = vmatpush1.bf16.msra.mxu0 %v1980
  %2671 = vmatprep.subr.bf16.mxu0 0
  %2672 = vmatpush1.bf16.msra.mxu0 0
  %2673 = vmatprep.subr.bf16.mxu0 0
  %2674 = vmatpush1.bf16.msra.mxu0 0
  %2675 = vmatprep.subr.bf16.mxu0 0
  %2676 = vmatpush1.bf16.msra.mxu0 0
  %2677 = vmatprep.subr.bf16.mxu0 0
  %2678 = vmatpush1.bf16.msra.mxu0 0
  %2679 = vmatprep.subr.bf16.mxu0 0
  %2680 = vmatpush1.bf16.msra.mxu0 0
  %2681 = vmatprep.subr.bf16.mxu0 0
  %2682 = vmatpush1.bf16.msra.mxu0 0
  %2683 = vmatprep.subr.bf16.mxu0 0
  %2684 = vmatpush1.bf16.msra.mxu0 0
  %2685 = vmatprep.subr.bf16.mxu0 0
  %2686 = vmatpush1.bf16.msra.mxu0 0
  %2687 = vmatprep.subr.bf16.mxu0 0
  %2688 = vmatpush1.bf16.msra.mxu0 0
  %2689 = vmatprep.subr.bf16.mxu0 0
  %2690 = vmatpush1.bf16.msra.mxu0 0
  %2691 = vmatprep.subr.bf16.mxu0 0
  %2692 = vmatpush1.bf16.msra.mxu0 0
  %2693 = vmatprep.subr.bf16.mxu0 0
  %2694 = vmatpush1.bf16.msra.mxu0 0
  %2695 = vmatprep.subr.bf16.mxu0 0
  %2696 = vmatpush1.bf16.msra.mxu0 0
  %2697 = vmatprep.subr.bf16.mxu0 0
  %2698 = vmatpush1.bf16.msra.mxu0 0
  %2699 = vmatprep.subr.bf16.mxu0 0
  %2700 = vmatpush1.bf16.msra.mxu0 0
  %2701 = vmatprep.mubr.bf16.mxu0 0
  %2702 = vmatmul.mubr.bf16.gmra.mrb[0].mxu0 %v2380
  %v2703 = vpop.f32.mrb[0].mxu0
  %v2704 = vadd.f32 %v2663, %v2703
  %v2705 = vpop.f32.mrb[0].mxu0
  %v2706 = vadd.f32 %v2665, %v2705
  %v2707 = vpop.f32.mrb[0].mxu0
  %v2708 = vpop.f32.mrb[0].mxu0
  %2709 = vdwg.mxu0
  %2710 = vmatprep.subr.bf16.mxu0 %v1599
  %2711 = vmatpush1.bf16.msra.mxu0 %v1598
  %2712 = vmatprep.subr.bf16.mxu0 %v1607
  %2713 = vmatpush1.bf16.msra.mxu0 %v1606
  %2714 = vmatprep.subr.bf16.mxu0 %v1615
  %2715 = vmatpush1.bf16.msra.mxu0 %v1614
  %2716 = vmatprep.subr.bf16.mxu0 %v1623
  %2717 = vmatpush1.bf16.msra.mxu0 %v1622
  %2718 = vmatprep.subr.bf16.mxu0 %v1631
  %2719 = vmatpush1.bf16.msra.mxu0 %v1630
  %2720 = vmatprep.subr.bf16.mxu0 %v1639
  %2721 = vmatpush1.bf16.msra.mxu0 %v1638
  %2722 = vmatprep.subr.bf16.mxu0 %v1647
  %2723 = vmatpush1.bf16.msra.mxu0 %v1646
  %2724 = vmatprep.subr.bf16.mxu0 %v1655
  %2725 = vmatpush1.bf16.msra.mxu0 %v1654
  %2726 = vmatprep.subr.bf16.mxu0 %v1663
  %2727 = vmatpush1.bf16.msra.mxu0 %v1662
  %2728 = vmatprep.subr.bf16.mxu0 %v1671
  %2729 = vmatpush1.bf16.msra.mxu0 %v1670
  %2730 = vmatprep.subr.bf16.mxu0 %v1679
  %2731 = vmatpush1.bf16.msra.mxu0 %v1678
  %2732 = vmatprep.subr.bf16.mxu0 %v1687
  %2733 = vmatpush1.bf16.msra.mxu0 %v1686
  %2734 = vmatprep.subr.bf16.mxu0 %v1695
  %2735 = vmatpush1.bf16.msra.mxu0 %v1694
  %2736 = vmatprep.subr.bf16.mxu0 %v1703
  %2737 = vmatpush1.bf16.msra.mxu0 %v1702
  %2738 = vmatprep.subr.bf16.mxu0 %v1711
  %2739 = vmatpush1.bf16.msra.mxu0 %v1710
  %2740 = vmatprep.subr.bf16.mxu0 %v1719
  %2741 = vmatpush1.bf16.msra.mxu0 %v1718
  %2742 = vmatprep.mubr.bf16.mxu0 %v20
  %2743 = vmatmul.mubr.bf16.gmra.mrb[0].mxu0 %v19
  %v2744 = vpop.f32.mrb[0].mxu0
  %v2745 = vadd.f32 -1.0, %v2744
  %v2746 = vpop.f32.mrb[0].mxu0
  %v2747 = vadd.f32 -1.0, %v2746
  %v2748 = vpop.f32.mrb[0].mxu0
  %v2749 = vpop.f32.mrb[0].mxu0
  %2750 = vdwg.mxu0
  %2751 = vmatprep.subr.bf16.mxu0 %v1727
  %2752 = vmatpush1.bf16.msra.mxu0 %v1726
  %2753 = vmatprep.subr.bf16.mxu0 %v1735
  %2754 = vmatpush1.bf16.msra.mxu0 %v1734
  %2755 = vmatprep.subr.bf16.mxu0 %v1743
  %2756 = vmatpush1.bf16.msra.mxu0 %v1742
  %2757 = vmatprep.subr.bf16.mxu0 %v1751
  %2758 = vmatpush1.bf16.msra.mxu0 %v1750
  %2759 = vmatprep.subr.bf16.mxu0 %v1759
  %2760 = vmatpush1.bf16.msra.mxu0 %v1758
  %2761 = vmatprep.subr.bf16.mxu0 %v1767
  %2762 = vmatpush1.bf16.msra.mxu0 %v1766
  %2763 = vmatprep.subr.bf16.mxu0 %v1775
  %2764 = vmatpush1.bf16.msra.mxu0 %v1774
  %2765 = vmatprep.subr.bf16.mxu0 %v1783
  %2766 = vmatpush1.bf16.msra.mxu0 %v1782
  %2767 = vmatprep.subr.bf16.mxu0 %v1791
  %2768 = vmatpush1.bf16.msra.mxu0 %v1790
  %2769 = vmatprep.subr.bf16.mxu0 %v1799
  %2770 = vmatpush1.bf16.msra.mxu0 %v1798
  %2771 = vmatprep.subr.bf16.mxu0 %v1807
  %2772 = vmatpush1.bf16.msra.mxu0 %v1806
  %2773 = vmatprep.subr.bf16.mxu0 %v1815
  %2774 = vmatpush1.bf16.msra.mxu0 %v1814
  %2775 = vmatprep.subr.bf16.mxu0 %v1823
  %2776 = vmatpush1.bf16.msra.mxu0 %v1822
  %2777 = vmatprep.subr.bf16.mxu0 %v1831
  %2778 = vmatpush1.bf16.msra.mxu0 %v1830
  %2779 = vmatprep.subr.bf16.mxu0 %v1839
  %2780 = vmatpush1.bf16.msra.mxu0 %v1838
  %2781 = vmatprep.subr.bf16.mxu0 %v1847
  %2782 = vmatpush1.bf16.msra.mxu0 %v1846
  %2783 = vmatprep.mubr.bf16.mxu0 %v22
  %2784 = vmatmul.mubr.bf16.gmra.mrb[0].mxu0 %v21
  %v2785 = vpop.f32.mrb[0].mxu0
  %v2786 = vadd.f32 %v2745, %v2785
  %v2787 = vpop.f32.mrb[0].mxu0
  %v2788 = vadd.f32 %v2747, %v2787
  %v2789 = vpop.f32.mrb[0].mxu0
  %v2790 = vpop.f32.mrb[0].mxu0
  %2791 = vdwg.mxu0
  %2792 = vmatprep.subr.bf16.mxu0 %v1855
  %2793 = vmatpush1.bf16.msra.mxu0 %v1854
  %2794 = vmatprep.subr.bf16.mxu0 %v1863
  %2795 = vmatpush1.bf16.msra.mxu0 %v1862
  %2796 = vmatprep.subr.bf16.mxu0 %v1871
  %2797 = vmatpush1.bf16.msra.mxu0 %v1870
  %2798 = vmatprep.subr.bf16.mxu0 %v1879
  %2799 = vmatpush1.bf16.msra.mxu0 %v1878
  %2800 = vmatprep.subr.bf16.mxu0 %v1887
  %2801 = vmatpush1.bf16.msra.mxu0 %v1886
  %2802 = vmatprep.subr.bf16.mxu0 %v1895
  %2803 = vmatpush1.bf16.msra.mxu0 %v1894
  %2804 = vmatprep.subr.bf16.mxu0 %v1903
  %2805 = vmatpush1.bf16.msra.mxu0 %v1902
  %2806 = vmatprep.subr.bf16.mxu0 %v1911
  %2807 = vmatpush1.bf16.msra.mxu0 %v1910
  %2808 = vmatprep.subr.bf16.mxu0 %v1919
  %2809 = vmatpush1.bf16.msra.mxu0 %v1918
  %2810 = vmatprep.subr.bf16.mxu0 %v1927
  %2811 = vmatpush1.bf16.msra.mxu0 %v1926
  %2812 = vmatprep.subr.bf16.mxu0 %v1935
  %2813 = vmatpush1.bf16.msra.mxu0 %v1934
  %2814 = vmatprep.subr.bf16.mxu0 %v1943
  %2815 = vmatpush1.bf16.msra.mxu0 %v1942
  %2816 = vmatprep.subr.bf16.mxu0 %v1951
  %2817 = vmatpush1.bf16.msra.mxu0 %v1950
  %2818 = vmatprep.subr.bf16.mxu0 %v1959
  %2819 = vmatpush1.bf16.msra.mxu0 %v1958
  %2820 = vmatprep.subr.bf16.mxu0 %v1967
  %2821 = vmatpush1.bf16.msra.mxu0 %v1966
  %2822 = vmatprep.subr.bf16.mxu0 %v1975
  %2823 = vmatpush1.bf16.msra.mxu0 %v1974
  %2824 = vmatprep.mubr.bf16.mxu0 %v24
  %2825 = vmatmul.mubr.bf16.gmra.mrb[0].mxu0 %v23
  %v2826 = vpop.f32.mrb[0].mxu0
  %v2827 = vadd.f32 %v2786, %v2826
  %v2828 = vpop.f32.mrb[0].mxu0
  %v2829 = vadd.f32 %v2788, %v2828
  %v2830 = vpop.f32.mrb[0].mxu0
  %v2831 = vpop.f32.mrb[0].mxu0
  %2832 = vdwg.mxu0
  %2833 = vmatprep.subr.bf16.mxu0 %v1983
  %2834 = vmatpush1.bf16.msra.mxu0 %v1982
  %2835 = vmatprep.subr.bf16.mxu0 0
  %2836 = vmatpush1.bf16.msra.mxu0 0
  %2837 = vmatprep.subr.bf16.mxu0 0
  %2838 = vmatpush1.bf16.msra.mxu0 0
  %2839 = vmatprep.subr.bf16.mxu0 0
  %2840 = vmatpush1.bf16.msra.mxu0 0
  %2841 = vmatprep.subr.bf16.mxu0 0
  %2842 = vmatpush1.bf16.msra.mxu0 0
  %2843 = vmatprep.subr.bf16.mxu0 0
  %2844 = vmatpush1.bf16.msra.mxu0 0
  %2845 = vmatprep.subr.bf16.mxu0 0
  %2846 = vmatpush1.bf16.msra.mxu0 0
  %2847 = vmatprep.subr.bf16.mxu0 0
  %2848 = vmatpush1.bf16.msra.mxu0 0
  %2849 = vmatprep.subr.bf16.mxu0 0
  %2850 = vmatpush1.bf16.msra.mxu0 0
  %2851 = vmatprep.subr.bf16.mxu0 0
  %2852 = vmatpush1.bf16.msra.mxu0 0
  %2853 = vmatprep.subr.bf16.mxu0 0
  %2854 = vmatpush1.bf16.msra.mxu0 0
  %2855 = vmatprep.subr.bf16.mxu0 0
  %2856 = vmatpush1.bf16.msra.mxu0 0
  %2857 = vmatprep.subr.bf16.mxu0 0
  %2858 = vmatpush1.bf16.msra.mxu0 0
  %2859 = vmatprep.subr.bf16.mxu0 0
  %2860 = vmatpush1.bf16.msra.mxu0 0
  %2861 = vmatprep.subr.bf16.mxu0 0
  %2862 = vmatpush1.bf16.msra.mxu0 0
  %2863 = vmatprep.subr.bf16.mxu0 0
  %2864 = vmatpush1.bf16.msra.mxu0 0
  %2865 = vmatprep.mubr.bf16.mxu0 0
  %2866 = vmatmul.mubr.bf16.gmra.mrb[0].mxu0 %v2380
  %v2867 = vpop.f32.mrb[0].mxu0
  %v2868 = vadd.f32 %v2827, %v2867
  %v2869 = vpop.f32.mrb[0].mxu0
  %v2870 = vadd.f32 %v2829, %v2869
  %v2871 = vpop.f32.mrb[0].mxu0
  %v2872 = vpop.f32.mrb[0].mxu0
  %2873 = vdwg.mxu0
  %2874 = vmatprep.subr.bf16.mxu0 %v1601
  %2875 = vmatpush1.bf16.msra.mxu0 %v1600
  %2876 = vmatprep.subr.bf16.mxu0 %v1609
  %2877 = vmatpush1.bf16.msra.mxu0 %v1608
  %2878 = vmatprep.subr.bf16.mxu0 %v1617
  %2879 = vmatpush1.bf16.msra.mxu0 %v1616
  %2880 = vmatprep.subr.bf16.mxu0 %v1625
  %2881 = vmatpush1.bf16.msra.mxu0 %v1624
  %2882 = vmatprep.subr.bf16.mxu0 %v1633
  %2883 = vmatpush1.bf16.msra.mxu0 %v1632
  %2884 = vmatprep.subr.bf16.mxu0 %v1641
  %2885 = vmatpush1.bf16.msra.mxu0 %v1640
  %2886 = vmatprep.subr.bf16.mxu0 %v1649
  %2887 = vmatpush1.bf16.msra.mxu0 %v1648
  %2888 = vmatprep.subr.bf16.mxu0 %v1657
  %2889 = vmatpush1.bf16.msra.mxu0 %v1656
  %2890 = vmatprep.subr.bf16.mxu0 %v1665
  %2891 = vmatpush1.bf16.msra.mxu0 %v1664
  %2892 = vmatprep.subr.bf16.mxu0 %v1673
  %2893 = vmatpush1.bf16.msra.mxu0 %v1672
  %2894 = vmatprep.subr.bf16.mxu0 %v1681
  %2895 = vmatpush1.bf16.msra.mxu0 %v1680
  %2896 = vmatprep.subr.bf16.mxu0 %v1689
  %2897 = vmatpush1.bf16.msra.mxu0 %v1688
  %2898 = vmatprep.subr.bf16.mxu0 %v1697
  %2899 = vmatpush1.bf16.msra.mxu0 %v1696
  %2900 = vmatprep.subr.bf16.mxu0 %v1705
  %2901 = vmatpush1.bf16.msra.mxu0 %v1704
  %2902 = vmatprep.subr.bf16.mxu0 %v1713
  %2903 = vmatpush1.bf16.msra.mxu0 %v1712
  %2904 = vmatprep.subr.bf16.mxu0 %v1721
  %2905 = vmatpush1.bf16.msra.mxu0 %v1720
  %2906 = vmatprep.mubr.bf16.mxu0 %v20
  %2907 = vmatmul.mubr.bf16.gmra.mrb[0].mxu0 %v19
  %v2908 = vpop.f32.mrb[0].mxu0
  %v2909 = vadd.f32 -1.0, %v2908
  %v2910 = vpop.f32.mrb[0].mxu0
  %v2911 = vadd.f32 -1.0, %v2910
  %v2912 = vpop.f32.mrb[0].mxu0
  %v2913 = vpop.f32.mrb[0].mxu0
  %2914 = vdwg.mxu0
  %2915 = vmatprep.subr.bf16.mxu0 %v1729
  %2916 = vmatpush1.bf16.msra.mxu0 %v1728
  %2917 = vmatprep.subr.bf16.mxu0 %v1737
  %2918 = vmatpush1.bf16.msra.mxu0 %v1736
  %2919 = vmatprep.subr.bf16.mxu0 %v1745
  %2920 = vmatpush1.bf16.msra.mxu0 %v1744
  %2921 = vmatprep.subr.bf16.mxu0 %v1753
  %2922 = vmatpush1.bf16.msra.mxu0 %v1752
  %2923 = vmatprep.subr.bf16.mxu0 %v1761
  %2924 = vmatpush1.bf16.msra.mxu0 %v1760
  %2925 = vmatprep.subr.bf16.mxu0 %v1769
  %2926 = vmatpush1.bf16.msra.mxu0 %v1768
  %2927 = vmatprep.subr.bf16.mxu0 %v1777
  %2928 = vmatpush1.bf16.msra.mxu0 %v1776
  %2929 = vmatprep.subr.bf16.mxu0 %v1785
  %2930 = vmatpush1.bf16.msra.mxu0 %v1784
  %2931 = vmatprep.subr.bf16.mxu0 %v1793
  %2932 = vmatpush1.bf16.msra.mxu0 %v1792
  %2933 = vmatprep.subr.bf16.mxu0 %v1801
  %2934 = vmatpush1.bf16.msra.mxu0 %v1800
  %2935 = vmatprep.subr.bf16.mxu0 %v1809
  %2936 = vmatpush1.bf16.msra.mxu0 %v1808
  %2937 = vmatprep.subr.bf16.mxu0 %v1817
  %2938 = vmatpush1.bf16.msra.mxu0 %v1816
  %2939 = vmatprep.subr.bf16.mxu0 %v1825
  %2940 = vmatpush1.bf16.msra.mxu0 %v1824
  %2941 = vmatprep.subr.bf16.mxu0 %v1833
  %2942 = vmatpush1.bf16.msra.mxu0 %v1832
  %2943 = vmatprep.subr.bf16.mxu0 %v1841
  %2944 = vmatpush1.bf16.msra.mxu0 %v1840
  %2945 = vmatprep.subr.bf16.mxu0 %v1849
  %2946 = vmatpush1.bf16.msra.mxu0 %v1848
  %2947 = vmatprep.mubr.bf16.mxu0 %v22
  %2948 = vmatmul.mubr.bf16.gmra.mrb[0].mxu0 %v21
  %v2949 = vpop.f32.mrb[0].mxu0
  %v2950 = vadd.f32 %v2909, %v2949
  %v2951 = vpop.f32.mrb[0].mxu0
  %v2952 = vadd.f32 %v2911, %v2951
  %v2953 = vpop.f32.mrb[0].mxu0
  %v2954 = vpop.f32.mrb[0].mxu0
  %2955 = vdwg.mxu0
  %2956 = vmatprep.subr.bf16.mxu0 %v1857
  %2957 = vmatpush1.bf16.msra.mxu0 %v1856
  %2958 = vmatprep.subr.bf16.mxu0 %v1865
  %2959 = vmatpush1.bf16.msra.mxu0 %v1864
  %2960 = vmatprep.subr.bf16.mxu0 %v1873
  %2961 = vmatpush1.bf16.msra.mxu0 %v1872
  %2962 = vmatprep.subr.bf16.mxu0 %v1881
  %2963 = vmatpush1.bf16.msra.mxu0 %v1880
  %2964 = vmatprep.subr.bf16.mxu0 %v1889
  %2965 = vmatpush1.bf16.msra.mxu0 %v1888
  %2966 = vmatprep.subr.bf16.mxu0 %v1897
  %2967 = vmatpush1.bf16.msra.mxu0 %v1896
  %2968 = vmatprep.subr.bf16.mxu0 %v1905
  %2969 = vmatpush1.bf16.msra.mxu0 %v1904
  %2970 = vmatprep.subr.bf16.mxu0 %v1913
  %2971 = vmatpush1.bf16.msra.mxu0 %v1912
  %2972 = vmatprep.subr.bf16.mxu0 %v1921
  %2973 = vmatpush1.bf16.msra.mxu0 %v1920
  %2974 = vmatprep.subr.bf16.mxu0 %v1929
  %2975 = vmatpush1.bf16.msra.mxu0 %v1928
  %2976 = vmatprep.subr.bf16.mxu0 %v1937
  %2977 = vmatpush1.bf16.msra.mxu0 %v1936
  %2978 = vmatprep.subr.bf16.mxu0 %v1945
  %2979 = vmatpush1.bf16.msra.mxu0 %v1944
  %2980 = vmatprep.subr.bf16.mxu0 %v1953
  %2981 = vmatpush1.bf16.msra.mxu0 %v1952
  %2982 = vmatprep.subr.bf16.mxu0 %v1961
  %2983 = vmatpush1.bf16.msra.mxu0 %v1960
  %2984 = vmatprep.subr.bf16.mxu0 %v1969
  %2985 = vmatpush1.bf16.msra.mxu0 %v1968
  %2986 = vmatprep.subr.bf16.mxu0 %v1977
  %2987 = vmatpush1.bf16.msra.mxu0 %v1976
  %2988 = vmatprep.mubr.bf16.mxu0 %v24
  %2989 = vmatmul.mubr.bf16.gmra.mrb[0].mxu0 %v23
  %v2990 = vpop.f32.mrb[0].mxu0
  %v2991 = vadd.f32 %v2950, %v2990
  %v2992 = vpop.f32.mrb[0].mxu0
  %v2993 = vadd.f32 %v2952, %v2992
  %v2994 = vpop.f32.mrb[0].mxu0
  %v2995 = vpop.f32.mrb[0].mxu0
  %2996 = vdwg.mxu0
  %2997 = vmatprep.subr.bf16.mxu0 %v1985
  %2998 = vmatpush1.bf16.msra.mxu0 %v1984
  %2999 = vmatprep.subr.bf16.mxu0 0
  %3000 = vmatpush1.bf16.msra.mxu0 0
  %3001 = vmatprep.subr.bf16.mxu0 0
  %3002 = vmatpush1.bf16.msra.mxu0 0
  %3003 = vmatprep.subr.bf16.mxu0 0
  %3004 = vmatpush1.bf16.msra.mxu0 0
  %3005 = vmatprep.subr.bf16.mxu0 0
  %3006 = vmatpush1.bf16.msra.mxu0 0
  %3007 = vmatprep.subr.bf16.mxu0 0
  %3008 = vmatpush1.bf16.msra.mxu0 0
  %3009 = vmatprep.subr.bf16.mxu0 0
  %3010 = vmatpush1.bf16.msra.mxu0 0
  %3011 = vmatprep.subr.bf16.mxu0 0
  %3012 = vmatpush1.bf16.msra.mxu0 0
  %3013 = vmatprep.subr.bf16.mxu0 0
  %3014 = vmatpush1.bf16.msra.mxu0 0
  %3015 = vmatprep.subr.bf16.mxu0 0
  %3016 = vmatpush1.bf16.msra.mxu0 0
  %3017 = vmatprep.subr.bf16.mxu0 0
  %3018 = vmatpush1.bf16.msra.mxu0 0
  %3019 = vmatprep.subr.bf16.mxu0 0
  %3020 = vmatpush1.bf16.msra.mxu0 0
  %3021 = vmatprep.subr.bf16.mxu0 0
  %3022 = vmatpush1.bf16.msra.mxu0 0
  %3023 = vmatprep.subr.bf16.mxu0 0
  %3024 = vmatpush1.bf16.msra.mxu0 0
  %3025 = vmatprep.subr.bf16.mxu0 0
  %3026 = vmatpush1.bf16.msra.mxu0 0
  %3027 = vmatprep.subr.bf16.mxu0 0
  %3028 = vmatpush1.bf16.msra.mxu0 0
  %3029 = vmatprep.mubr.bf16.mxu0 0
  %3030 = vmatmul.mubr.bf16.gmra.mrb[0].mxu0 %v2380
  %v3031 = vpop.f32.mrb[0].mxu0
  %v3032 = vadd.f32 %v2991, %v3031
  %v3033 = vpop.f32.mrb[0].mxu0
  %v3034 = vadd.f32 %v2993, %v3033
  %v3035 = vpop.f32.mrb[0].mxu0
  %v3036 = vpop.f32.mrb[0].mxu0
  %3037 = vdwg.mxu0
  %3038 = vst [vmem:[%s2] sm:$0xff] %v2540
  %3039 = vst [vmem:[%s2 + $0x8] sm:$0xff] %v2542
  %3040 = vst [vmem:[%s2 + $0x10] sm:$0xff] %v2704
  %3041 = vst [vmem:[%s2 + $0x18] sm:$0xff] %v2706
  %3042 = vst [vmem:[%s2 + $0x20] sm:$0xff] %v2868
  %3043 = vst [vmem:[%s2 + $0x28] sm:$0xff] %v2870
  %3044 = vst [vmem:[%s2 + $0x30] sm:$0xff] %v3032
  %3045 = vst [vmem:[%s2 + $0x38] sm:$0xff] %v3034
  // Predicated region
  $region10: #{_mnist_transform_eval.1} parent=0 // pred_check
    _
  $region11: #{_mnist_transform_eval.1} parent=0 // pred_check_branch
    %3047 = sbr.rel (0) target = $region13
  $region12: #{_mnist_transform_eval.1} parent=0 // pred_region
    _
  $region13: #{_mnist_transform_eval.1} parent=0 // pred_fallthru
    _
  // Predicated region
  $region14: #{_mnist_transform_eval.1} parent=0 // pred_check
    _
  $region15: #{_mnist_transform_eval.1} parent=0 // pred_check_branch
    %3049 = sbr.rel (0) target = $region17
  $region16: #{_mnist_transform_eval.1} parent=0 // pred_region
    _
  $region17: #{_mnist_transform_eval.1} parent=0 // pred_fallthru
    _

</llo_original>
